<compile_context>
chip_gen: v7x
topology: tpu7x:2x2x1
jax: 0.10.0
libtpu: 0.0.40
codegen_flags: <defaults>
</compile_context>

<pallas_src>
import jax
import jax.numpy as jnp
from jax.experimental import pallas as pl
from jax.experimental.pallas import tpu as pltpu

IN_DIM = 3072
H1, H2, OUT = 500, 50, 10
H1_PAD, H2_PAD, OUT_PAD = 512, 128, 128
NEG_INF = -1e30
DEFAULT_TB = 512            # batch tile (sweep knob: 256 / 512 / 1024)
SMALL_BATCH_K_CHUNKS = 4    # fc1 K-split when the whole batch is one tile


def _round_up(x, m):
    return ((x + m - 1) // m) * m


def _pick_tile(b, max_tb=DEFAULT_TB):
    """Batch tile: multiple of 8, <= max_tb, minimizing padded (wasted) rows."""
    if b <= max_tb:
        return _round_up(b, 8)
    best_tb = max_tb
    best_pad = _round_up(b, max_tb) - b
    for cand in range(max_tb - 64, 63, -64):
        pad = _round_up(b, cand) - b
        if pad < best_pad:
            best_tb, best_pad = cand, pad
    return best_tb


def _mlp_kernel(x_ref, w1_ref, b1_ref, w2_ref, b2_ref, w3_ref, b3_ref,
                o_ref, h1_acc):
    k = pl.program_id(1)

    # fc1: K-chunked bf16 MXU matmul, f32 accumulation in VMEM scratch.
    @pl.when(k == 0)
    def _():
        h1_acc[...] = jnp.zeros_like(h1_acc)

    h1_acc[...] += jnp.dot(x_ref[...], w1_ref[...],
                           preferred_element_type=jnp.float32)

    # Epilogue only on the last K chunk.
    @pl.when(k == pl.num_programs(1) - 1)
    def _():
        h1 = jnp.maximum(h1_acc[...] + b1_ref[...], 0.0).astype(jnp.bfloat16)
        h2 = jnp.dot(h1, w2_ref[...], preferred_element_type=jnp.float32)
        h2 = jnp.maximum(h2 + b2_ref[...], 0.0).astype(jnp.bfloat16)
        # Padded logit lanes carry a -1e30 bias => exp() underflows to exactly
        # 0 in the f32 softmax sum.  Keep this epilogue in f32.
        logits = (jnp.dot(h2, w3_ref[...], preferred_element_type=jnp.float32)
                  + b3_ref[...])
        m = jnp.max(logits, axis=-1, keepdims=True)
        shifted = logits - m
        lse = jnp.log(jnp.sum(jnp.exp(shifted), axis=-1, keepdims=True))
        o_ref[...] = shifted - lse


def pad_params(params):
    """Pad/cast parameters once (outside the per-forward hot path).

    Weights are stored transposed (in_features, out_features) in bf16,
    biases in f32.  Padded logit lanes get a -1e30 bias so log-softmax
    ignores them.
    """
    w1, b1, w2, b2, w3, b3 = params
    w1p = jnp.zeros((IN_DIM, H1_PAD), jnp.bfloat16).at[:, :H1].set(
        w1.astype(jnp.bfloat16))
    b1p = jnp.zeros((1, H1_PAD), jnp.float32).at[:, :H1].set(b1)
    w2p = jnp.zeros((H1_PAD, H2_PAD), jnp.bfloat16).at[:H1, :H2].set(
        w2.astype(jnp.bfloat16))
    b2p = jnp.zeros((1, H2_PAD), jnp.float32).at[:, :H2].set(b2)
    w3p = jnp.zeros((H2_PAD, OUT_PAD), jnp.bfloat16).at[:H2, :OUT].set(
        w3.astype(jnp.bfloat16))
    b3p = jnp.full((1, OUT_PAD), NEG_INF, jnp.float32).at[:, :OUT].set(b3)
    return (w1p, b1p, w2p, b2p, w3p, b3p)


@jax.jit
def cifar_net_forward(x_nchw, padded_params):
    """x_nchw: (B, 3, 32, 32) float32 -> (B, 10) log-probabilities."""
    w1p, b1p, w2p, b2p, w3p, b3p = padded_params
    b = x_nchw.shape[0]
    # bf16 x halves the dominant fc1 input stream (matches reference recipe).
    x = x_nchw.reshape(b, IN_DIM).astype(jnp.bfloat16)

    tb = _pick_tile(b)
    b_pad = _round_up(b, tb)
    if b_pad != b:
        x = jnp.pad(x, ((0, b_pad - b), (0, 0)))
    n_bt = b_pad // tb

    # Latency regime (single batch tile): K-chunk fc1 so the w1 DMA overlaps
    # the partial matmuls.  Throughput regime: k_chunks=1 -> w1 index map is
    # constant, so it is DMA'd exactly once and stays VMEM-resident.
    k_chunks = SMALL_BATCH_K_CHUNKS if n_bt == 1 else 1
    kc = IN_DIM // k_chunks
    grid = (n_bt, k_chunks)

    const = lambda shape: pl.BlockSpec(shape, lambda i, k: (0, 0))
    out = pl.pallas_call(
        _mlp_kernel,
        out_shape=jax.ShapeDtypeStruct((b_pad, OUT_PAD), jnp.float32),
        grid=grid,
        in_specs=[
            pl.BlockSpec((tb, kc), lambda i, k: (i, k)),      # x tile (pipelined)
            pl.BlockSpec((kc, H1_PAD), lambda i, k: (k, 0)),  # w1 (K-chunked / const)
            const((1, H1_PAD)),                               # b1
            const((H1_PAD, H2_PAD)), const((1, H2_PAD)),      # w2, b2 (VMEM-resident)
            const((H2_PAD, OUT_PAD)), const((1, OUT_PAD)),    # w3, b3 (VMEM-resident)
        ],
        out_specs=pl.BlockSpec((tb, OUT_PAD), lambda i, k: (i, 0)),
        scratch_shapes=[pltpu.VMEM((tb, H1_PAD), jnp.float32)],  # h1 accumulator
        compiler_params=pltpu.CompilerParams(
            dimension_semantics=("parallel", "arbitrary"),
            vmem_limit_bytes=32 << 20,
        ),
    )(x, w1p, b1p, w2p, b2p, w3p, b3p)
    return out[:b, :OUT]


def init_params(key):
    """Deterministic init mimicking nn.Linear's U(-1/sqrt(fan_in), 1/sqrt(fan_in))."""
    ks = jax.random.split(key, 6)

    def linear(kw, kb, fan_in, fan_out):
        bound = 1.0 / jnp.sqrt(fan_in)
        w = jax.random.uniform(kw, (fan_in, fan_out), jnp.float32, -bound, bound)
        b = jax.random.uniform(kb, (fan_out,), jnp.float32, -bound, bound)
        return w, b

    w1, b1 = linear(ks[0], ks[1], IN_DIM, H1)
    w2, b2 = linear(ks[2], ks[3], H1, H2)
    w3, b3 = linear(ks[4], ks[5], H2, OUT)
    return (w1, b1, w2, b2, w3, b3)


def reference_forward(x_nchw, params):
    """Pure-JAX reference using the same bf16-matmul / f32-accumulate recipe."""
    w1, b1, w2, b2, w3, b3 = params
    x = x_nchw.reshape(x_nchw.shape[0], IN_DIM).astype(jnp.bfloat16)
    h1 = jnp.maximum(
        jnp.dot(x, w1.astype(jnp.bfloat16), preferred_element_type=jnp.float32) + b1, 0.0)
    h2 = jnp.maximum(
        jnp.dot(h1.astype(jnp.bfloat16), w2.astype(jnp.bfloat16),
                preferred_element_type=jnp.float32) + b2, 0.0)
    logits = jnp.dot(h2.astype(jnp.bfloat16), w3.astype(jnp.bfloat16),
                     preferred_element_type=jnp.float32) + b3
    return jax.nn.log_softmax(logits, axis=-1)


if __name__ == "__main__":
    key = jax.random.PRNGKey(0)
    kx, kp = jax.random.split(key)
    # CIFAR-shaped input (batch=2, NCHW), consistent with x.view(-1, 3072).
    x = jax.random.normal(kx, (2, 3, 32, 32), jnp.float32)
    params = init_params(kp)
    padded = pad_params(params)  # pad/cast ONCE, outside the forward hot path

    out = cifar_net_forward(x, padded)
    out = jax.block_until_ready(out)

    ref = reference_forward(x, params)
    assert out.shape == (2, 10), out.shape
    assert jnp.allclose(out, ref, atol=2e-3, rtol=2e-3), (
        float(jnp.max(jnp.abs(out - ref)))
    )
    print("KERNEL_OK")
</pallas_src>

<mosaic_0001>
module attributes {stable_mosaic.version = 11 : i64} {
  func.func @_mlp_kernel(%arg0: i32, %arg1: i32, %arg2: memref<8x768xbf16, #tpu.memory_space<vmem>>, %arg3: memref<768x512xbf16, #tpu.memory_space<vmem>>, %arg4: memref<1x512xf32, #tpu.memory_space<vmem>>, %arg5: memref<512x128xbf16, #tpu.memory_space<vmem>>, %arg6: memref<1x128xf32, #tpu.memory_space<vmem>>, %arg7: memref<128x128xbf16, #tpu.memory_space<vmem>>, %arg8: memref<1x128xf32, #tpu.memory_space<vmem>>, %arg9: memref<8x128xf32, #tpu.memory_space<vmem>>, %arg10: memref<8x512xf32, #tpu.memory_space<vmem>>) attributes {dimension_semantics = [#tpu.dimension_semantics<parallel>, #tpu.dimension_semantics<arbitrary>], iteration_bounds = array<i64: 1, 4>, scalar_prefetch = 0 : i64, scratch_operands = 1 : i64, tpu.core_type = #tpu.core_type<tc>, window_params = [{transform_indices = @transform_0, window_bounds = array<i64: 8, 768>}, {transform_indices = @transform_1, window_bounds = array<i64: 768, 512>}, {pipeline_mode = #tpu.pipeline_mode<synchronous>, transform_indices = @transform_2, window_bounds = array<i64: 1, 512>}, {pipeline_mode = #tpu.pipeline_mode<synchronous>, transform_indices = @transform_3, window_bounds = array<i64: 512, 128>}, {pipeline_mode = #tpu.pipeline_mode<synchronous>, transform_indices = @transform_4, window_bounds = array<i64: 1, 128>}, {pipeline_mode = #tpu.pipeline_mode<synchronous>, transform_indices = @transform_5, window_bounds = array<i64: 128, 128>}, {pipeline_mode = #tpu.pipeline_mode<synchronous>, transform_indices = @transform_6, window_bounds = array<i64: 1, 128>}, {transform_indices = @transform_7, window_bounds = array<i64: 8, 128>}]} {
    %c0_i32 = arith.constant 0 : i32
    %0 = arith.cmpi eq, %arg1, %c0_i32 : i32
    %1 = arith.extui %0 : i1 to i32
    %c0_i32_0 = arith.constant 0 : i32
    %2 = arith.cmpi ne, %1, %c0_i32_0 : i32
    scf.if %2 {
      %cst_9 = arith.constant 0.000000e+00 : f32
      %12 = vector.broadcast %cst_9 : f32 to vector<8x512xf32>
      %c0_10 = arith.constant 0 : index
      %c0_11 = arith.constant 0 : index
      %13 = vector.load %arg10[%c0_10, %c0_11] : memref<8x512xf32, #tpu.memory_space<vmem>>, vector<8x512xf32>
      tpu.vector_store %arg10[%c0_10, %c0_11], %12 {strides = array<i32>} : memref<8x512xf32, #tpu.memory_space<vmem>>, vector<8x512xf32>,
    } else {
    }
    %c0 = arith.constant 0 : index
    %c0_1 = arith.constant 0 : index
    %3 = vector.load %arg10[%c0, %c0_1] : memref<8x512xf32, #tpu.memory_space<vmem>>, vector<8x512xf32>
    %c0_2 = arith.constant 0 : index
    %c0_3 = arith.constant 0 : index
    %4 = vector.load %arg2[%c0_2, %c0_3] : memref<8x768xbf16, #tpu.memory_space<vmem>>, vector<8x768xbf16>
    %c0_4 = arith.constant 0 : index
    %c0_5 = arith.constant 0 : index
    %5 = vector.load %arg3[%c0_4, %c0_5] : memref<768x512xbf16, #tpu.memory_space<vmem>>, vector<768x512xbf16>
    %cst = arith.constant dense<0.000000e+00> : vector<8x512xf32>
    %6 = tpu.matmul %4, %5, %cst {dimension_numbers = #tpu.dot_dimension_numbers<[1], [0], [0], [1], [0, 0, 1, 1], [], []>} : vector<8x768xbf16>, vector<768x512xbf16>, vector<8x512xf32> -> vector<8x512xf32>
    %7 = arith.addf %3, %6 : vector<8x512xf32>
    %c0_6 = arith.constant 0 : index
    %c0_7 = arith.constant 0 : index
    %8 = vector.load %arg10[%c0_6, %c0_7] : memref<8x512xf32, #tpu.memory_space<vmem>>, vector<8x512xf32>
    tpu.vector_store %arg10[%c0_6, %c0_7], %7 {strides = array<i32>} : memref<8x512xf32, #tpu.memory_space<vmem>>, vector<8x512xf32>,
    %c3_i32 = arith.constant 3 : i32
    %9 = arith.cmpi eq, %arg1, %c3_i32 : i32
    %10 = arith.extui %9 : i1 to i32
    %c0_i32_8 = arith.constant 0 : i32
    %11 = arith.cmpi ne, %10, %c0_i32_8 : i32
    scf.if %11 {
      %c0_9 = arith.constant 0 : index
      %c0_10 = arith.constant 0 : index
      %12 = vector.load %arg10[%c0_9, %c0_10] : memref<8x512xf32, #tpu.memory_space<vmem>>, vector<8x512xf32>
      %c0_11 = arith.constant 0 : index
      %c0_12 = arith.constant 0 : index
      %13 = vector.load %arg4[%c0_11, %c0_12] : memref<1x512xf32, #tpu.memory_space<vmem>>, vector<1x512xf32>
      %14 = vector.broadcast %13 : vector<1x512xf32> to vector<8x512xf32>
      %15 = arith.addf %12, %14 : vector<8x512xf32>
      %cst_13 = arith.constant 0.000000e+00 : f32
      %16 = vector.broadcast %cst_13 : f32 to vector<8x512xf32>
      %17 = arith.maximumf %15, %16 : vector<8x512xf32>
      %18 = arith.truncf %17 : vector<8x512xf32> to vector<8x512xbf16>
      %c0_14 = arith.constant 0 : index
      %c0_15 = arith.constant 0 : index
      %19 = vector.load %arg5[%c0_14, %c0_15] : memref<512x128xbf16, #tpu.memory_space<vmem>>, vector<512x128xbf16>
      %cst_16 = arith.constant dense<0.000000e+00> : vector<8x128xf32>
      %20 = tpu.matmul %18, %19, %cst_16 {dimension_numbers = #tpu.dot_dimension_numbers<[1], [0], [0], [1], [0, 0, 1, 1], [], []>} : vector<8x512xbf16>, vector<512x128xbf16>, vector<8x128xf32> -> vector<8x128xf32>
      %c0_17 = arith.constant 0 : index
      %c0_18 = arith.constant 0 : index
      %21 = vector.load %arg6[%c0_17, %c0_18] : memref<1x128xf32, #tpu.memory_space<vmem>>, vector<1x128xf32>
      %22 = vector.broadcast %21 : vector<1x128xf32> to vector<8x128xf32>
      %23 = arith.addf %20, %22 : vector<8x128xf32>
      %cst_19 = arith.constant 0.000000e+00 : f32
      %24 = vector.broadcast %cst_19 : f32 to vector<8x128xf32>
      %25 = arith.maximumf %23, %24 : vector<8x128xf32>
      %26 = arith.truncf %25 : vector<8x128xf32> to vector<8x128xbf16>
      %c0_20 = arith.constant 0 : index
      %c0_21 = arith.constant 0 : index
      %27 = vector.load %arg7[%c0_20, %c0_21] : memref<128x128xbf16, #tpu.memory_space<vmem>>, vector<128x128xbf16>
      %cst_22 = arith.constant dense<0.000000e+00> : vector<8x128xf32>
      %28 = tpu.matmul %26, %27, %cst_22 {dimension_numbers = #tpu.dot_dimension_numbers<[1], [0], [0], [1], [0, 0, 1, 1], [], []>} : vector<8x128xbf16>, vector<128x128xbf16>, vector<8x128xf32> -> vector<8x128xf32>
      %c0_23 = arith.constant 0 : index
      %c0_24 = arith.constant 0 : index
      %29 = vector.load %arg8[%c0_23, %c0_24] : memref<1x128xf32, #tpu.memory_space<vmem>>, vector<1x128xf32>
      %30 = vector.broadcast %29 : vector<1x128xf32> to vector<8x128xf32>
      %31 = arith.addf %28, %30 : vector<8x128xf32>
      %cst_25 = arith.constant dense<0xFF800000> : vector<8xf32>
      %32 = vector.multi_reduction <maximumf>, %31, %cst_25 [1] : vector<8x128xf32> to vector<8xf32>
      %33 = vector.shape_cast %32 : vector<8xf32> to vector<8x1xf32>
      %34 = vector.broadcast %33 : vector<8x1xf32> to vector<8x128xf32>
      %35 = arith.subf %31, %34 : vector<8x128xf32>
      %36 = math.exp %35 : vector<8x128xf32>
      %cst_26 = arith.constant dense<0.000000e+00> : vector<8xf32>
      %37 = vector.multi_reduction <add>, %36, %cst_26 [1] : vector<8x128xf32> to vector<8xf32>
      %38 = vector.shape_cast %37 : vector<8xf32> to vector<8x1xf32>
      %39 = math.log %38 : vector<8x1xf32>
      %40 = vector.broadcast %39 : vector<8x1xf32> to vector<8x128xf32>
      %41 = arith.subf %35, %40 : vector<8x128xf32>
      %c0_27 = arith.constant 0 : index
      %c0_28 = arith.constant 0 : index
      %42 = vector.load %arg9[%c0_27, %c0_28] : memref<8x128xf32, #tpu.memory_space<vmem>>, vector<8x128xf32>
      tpu.vector_store %arg9[%c0_27, %c0_28], %41 {strides = array<i32>} : memref<8x128xf32, #tpu.memory_space<vmem>>, vector<8x128xf32>,
    } else {
    }
    return
  }
  func.func @transform_0(%arg0: i32, %arg1: i32) -> (i32, i32) {
    %c0_i32 = arith.constant 0 : i32
    return %arg0, %arg1 : i32, i32
  }
  func.func @transform_1(%arg0: i32, %arg1: i32) -> (i32, i32) {
    %c0_i32 = arith.constant 0 : i32
    %c0_i32_0 = arith.constant 0 : i32
    return %arg1, %c0_i32 : i32, i32
  }
  func.func @transform_2(%arg0: i32, %arg1: i32) -> (i32, i32) {
    %c0_i32 = arith.constant 0 : i32
    %c0_i32_0 = arith.constant 0 : i32
    %c0_i32_1 = arith.constant 0 : i32
    return %c0_i32, %c0_i32_0 : i32, i32
  }
  func.func @transform_3(%arg0: i32, %arg1: i32) -> (i32, i32) {
    %c0_i32 = arith.constant 0 : i32
    %c0_i32_0 = arith.constant 0 : i32
    %c0_i32_1 = arith.constant 0 : i32
    return %c0_i32, %c0_i32_0 : i32, i32
  }
  func.func @transform_4(%arg0: i32, %arg1: i32) -> (i32, i32) {
    %c0_i32 = arith.constant 0 : i32
    %c0_i32_0 = arith.constant 0 : i32
    %c0_i32_1 = arith.constant 0 : i32
    return %c0_i32, %c0_i32_0 : i32, i32
  }
  func.func @transform_5(%arg0: i32, %arg1: i32) -> (i32, i32) {
    %c0_i32 = arith.constant 0 : i32
    %c0_i32_0 = arith.constant 0 : i32
    %c0_i32_1 = arith.constant 0 : i32
    return %c0_i32, %c0_i32_0 : i32, i32
  }
  func.func @transform_6(%arg0: i32, %arg1: i32) -> (i32, i32) {
    %c0_i32 = arith.constant 0 : i32
    %c0_i32_0 = arith.constant 0 : i32
    %c0_i32_1 = arith.constant 0 : i32
    return %c0_i32, %c0_i32_0 : i32, i32
  }
  func.func @transform_7(%arg0: i32, %arg1: i32) -> (i32, i32) {
    %c0_i32 = arith.constant 0 : i32
    %c0_i32_0 = arith.constant 0 : i32
    return %arg0, %c0_i32 : i32, i32
  }
}

</mosaic_0001>

<llo_original>
// kernel: cifar_net_forward.1
$region0: #{cifar_net_forward.1}
  #allocation0 [shape = 'u32[]', space=smem, size = 0x4, offset = 0x4, fixed_abs, tag = 'smem constant byte address 0x4 - core index']
  #allocation1 [shape = 'u32[144,128]{1,0:T(1,128)}', space=vmem, size = 0x12000, scoped, tag = 'internal scratch']
  #allocation2 [shape = 'f32[8,512]{1,0:T(8,128)}', space=vmem, size = 0x4000, scoped, tag = 'scratch operand']
  %s0 = inlined_call_operand.vmem [shape: bf16[8,3072], index: 0, kind: input, shape index: {}]
  %s1 = inlined_call_operand.hbm [shape: bf16[3072,512], index: 1, kind: input, shape index: {}]
  %s2 = inlined_call_operand.hbm [shape: f32[1,512], index: 2, kind: input, shape index: {}]
  %s3 = inlined_call_operand.hbm [shape: bf16[512,128], index: 3, kind: input, shape index: {}]
  %s4 = inlined_call_operand.hbm [shape: f32[1,128], index: 4, kind: input, shape index: {}]
  %s5 = inlined_call_operand.hbm [shape: bf16[128,128], index: 5, kind: input, shape index: {}]
  %s6 = inlined_call_operand.hbm [shape: f32[1,128], index: 6, kind: input, shape index: {}]
  %s7 = inlined_call_operand.vmem [shape: f32[8,128], index: 7, kind: output, shape index: {}]
  %s8 = sld [smem:[#allocation0]]
  $region93: #{cifar_net_forward.1} parent=0
    _
  %s10 = ssub.s32 1, %s8
  %s11 = scalar_select 0, %s10, %s8
  $region1: #{cifar_net_forward.1} parent=0
    #allocation3 [shape = 'u8[1572864]{0}', space=vmem, size = 0x180000, scoped, tag = 'input window, operand 1']
    #allocation4 [shape = 's32[2]{0}', space=sflag, size = 0x8, scoped, tag = 'scoped memory for cifar_net_forward.1']
    #allocation5 [shape = 'u8[2048]{0}', space=vmem, size = 0x800, scoped, tag = 'input window, operand 2, single buffered']
    #allocation6 [shape = 's32[1]{0}', space=sflag, size = 0x4, scoped, tag = 'scoped memory for cifar_net_forward.1']
    #allocation7 [shape = 'u8[131072]{0}', space=vmem, size = 0x20000, scoped, tag = 'input window, operand 3, single buffered']
    #allocation8 [shape = 'u8[512]{0}', space=vmem, size = 0x400, scoped, tag = 'input window, operand 4, single buffered']
    #allocation9 [shape = 's32[1]{0}', space=sflag, size = 0x4, scoped, tag = 'scoped memory for cifar_net_forward.1']
    #allocation10 [shape = 'u8[32768]{0}', space=vmem, size = 0x8000, scoped, tag = 'input window, operand 5, single buffered']
    #allocation11 [shape = 'u8[512]{0}', space=vmem, size = 0x400, scoped, tag = 'input window, operand 6, single buffered']
    #allocation12 [shape = 's32[1]{0}', space=sflag, size = 0x4, scoped, tag = 'scoped memory for cifar_net_forward.1']
    %12 = vsyncpa [#allocation4], 0
    %s13 = scalar_lea.sflag [#allocation4], 1
    %14 = vsyncpa %s13, 0
    %15 = vsyncpa [#allocation6], 0
    %16 = vsyncpa [#allocation9], 0
    %17 = vsyncpa [#allocation12], 0
    loop: start=0, step=1, limit=6
    $region2: #{cifar_net_forward.1} parent=1 // loop_pre_header
      _
    $region3: #{cifar_net_forward.1} parent=1 // loop_header
      %s19 = sphi 0, %s23
      %p20 = scmp.ge.s32.totalorder %s19, 6
      %s26 = sphi 0, %s38
      %s27 = sphi 0, %s34
      %s28 = sphi 0, %s26
      %s29 = sphi 0, %s27
      %s30 = sphi 0, %s28
      %s31 = sphi 0, %s29
      %s43 = sphi 0, %s45
      %s46 = sphi 0, %s43
      %s47 = sphi 0, %s46
      %s63 = sphi 0, %s47
      %s69 = sphi 0, %s71
      %s72 = sphi 0, %s69
      %s73 = sphi 0, %s72
      %s89 = sphi 0, %s73
      %s93 = sphi 0, %s93
      %s95 = sphi 0, %s93
      %s96 = sphi 0, %s95
      %s110 = sphi 0, %s96
      %s114 = sphi 0, %s114
      %s116 = sphi 0, %s114
      %s117 = sphi 0, %s116
      %s131 = sphi 0, %s117
      %s135 = sphi 0, %s135
      %s137 = sphi 0, %s135
      %s138 = sphi 0, %s137
      %s152 = sphi 0, %s138
      %s156 = sphi 0, %s156
      %s158 = sphi 0, %s156
      %s159 = sphi 0, %s158
      %s173 = sphi 0, %s159
      %s177 = sphi 0, %s177
      %s179 = sphi 0, %s177
      %s180 = sphi 0, %s179
      %s194 = sphi 0, %s180
      %s200 = sphi 0, %s202
      %s203 = sphi 0, %s200
      %s204 = sphi 0, %s203
      %s220 = sphi 0, %s204
    $region4: #{cifar_net_forward.1} parent=1 // loop_header_branch
      %22 = sbr.rel (%p20) target = $region8
    $region5: #{cifar_net_forward.1} parent=1 // loop_body
      %s24 = ssub.s32 %s19, 1
      %s25 = ssub.s32 %s19, 2
      %s32 = sadd.s32 1, %s27
      %p33 = scmp.ge.s32.totalorder %s32, 4
      %s34 = scalar_select %p33, 0, %s32
      %s35 = sadd.s32 1, %s26
      %s36 = scalar_select %p33, %s35, %s26
      %p37 = scmp.ge.s32.totalorder %s36, 1
      %s38 = scalar_select %p37, 0, %s36
      %s39 = ssub.s32 %s26, %s38
      %s40 = ssub.s32 %s27, %s34
      %s41 = sor.u32 %s39, %s40
      %p42 = scmp.eq.s32.totalorder %s41, 0
      %s44 = sadd.s32 %s43, 1
      %s45 = scalar_select %p42, %s43, %s44
      %p48 = pneg %p42
      %p49 = scmp.eq.s32.totalorder %s19, 3
      %p50 = por %p48, %p49
      %p51 = scmp.ne.s32.totalorder %s43, %s46
      %p52 = scmp.eq.s32.totalorder %s19, 0
      %p53 = por %p51, %p52
      %p54 = scmp.ne.s32.totalorder %s43, %s46
      %p55 = scmp.eq.s32.totalorder %s24, 3
      %p56 = por %p54, %p55
      %p57 = scmp.ne.s32.totalorder %s46, %s47
      %p58 = scmp.eq.s32.totalorder %s24, 0
      %p59 = por %p57, %p58
      %p60 = scmp.ne.s32.totalorder %s46, %s47
      %p61 = scmp.eq.s32.totalorder %s25, 3
      %p62 = por %p60, %p61
      %p64 = scmp.ne.s32.totalorder %s47, %s63
      %p65 = scmp.eq.s32.totalorder %s25, 0
      %p66 = por %p64, %p65
      %s67 = ssub.s32 %s27, %s34
      %p68 = scmp.eq.s32.totalorder %s67, 0
      %s70 = sadd.s32 %s69, 1
      %s71 = scalar_select %p68, %s69, %s70
      %p74 = pneg %p68
      %p75 = scmp.eq.s32.totalorder %s19, 3
      %p76 = por %p74, %p75
      %p77 = scmp.ne.s32.totalorder %s69, %s72
      %p78 = scmp.eq.s32.totalorder %s19, 0
      %p79 = por %p77, %p78
      %p80 = scmp.ne.s32.totalorder %s69, %s72
      %p81 = scmp.eq.s32.totalorder %s24, 3
      %p82 = por %p80, %p81
      %p83 = scmp.ne.s32.totalorder %s72, %s73
      %p84 = scmp.eq.s32.totalorder %s24, 0
      %p85 = por %p83, %p84
      %p86 = scmp.ne.s32.totalorder %s72, %s73
      %p87 = scmp.eq.s32.totalorder %s25, 3
      %p88 = por %p86, %p87
      %p90 = scmp.ne.s32.totalorder %s73, %s89
      %p91 = scmp.eq.s32.totalorder %s25, 0
      %p92 = por %p90, %p91
      %s94 = sadd.s32 %s93, 1
      %p97 = scmp.eq.s32.totalorder %s19, 3
      %p98 = scmp.ne.s32.totalorder %s93, %s95
      %p99 = scmp.eq.s32.totalorder %s19, 0
      %p100 = por %p98, %p99
      %p101 = scmp.ne.s32.totalorder %s93, %s95
      %p102 = scmp.eq.s32.totalorder %s24, 3
      %p103 = por %p101, %p102
      %p104 = scmp.ne.s32.totalorder %s95, %s96
      %p105 = scmp.eq.s32.totalorder %s24, 0
      %p106 = por %p104, %p105
      %p107 = scmp.ne.s32.totalorder %s95, %s96
      %p108 = scmp.eq.s32.totalorder %s25, 3
      %p109 = por %p107, %p108
      %p111 = scmp.ne.s32.totalorder %s96, %s110
      %p112 = scmp.eq.s32.totalorder %s25, 0
      %p113 = por %p111, %p112
      %s115 = sadd.s32 %s114, 1
      %p118 = scmp.eq.s32.totalorder %s19, 3
      %p119 = scmp.ne.s32.totalorder %s114, %s116
      %p120 = scmp.eq.s32.totalorder %s19, 0
      %p121 = por %p119, %p120
      %p122 = scmp.ne.s32.totalorder %s114, %s116
      %p123 = scmp.eq.s32.totalorder %s24, 3
      %p124 = por %p122, %p123
      %p125 = scmp.ne.s32.totalorder %s116, %s117
      %p126 = scmp.eq.s32.totalorder %s24, 0
      %p127 = por %p125, %p126
      %p128 = scmp.ne.s32.totalorder %s116, %s117
      %p129 = scmp.eq.s32.totalorder %s25, 3
      %p130 = por %p128, %p129
      %p132 = scmp.ne.s32.totalorder %s117, %s131
      %p133 = scmp.eq.s32.totalorder %s25, 0
      %p134 = por %p132, %p133
      %s136 = sadd.s32 %s135, 1
      %p139 = scmp.eq.s32.totalorder %s19, 3
      %p140 = scmp.ne.s32.totalorder %s135, %s137
      %p141 = scmp.eq.s32.totalorder %s19, 0
      %p142 = por %p140, %p141
      %p143 = scmp.ne.s32.totalorder %s135, %s137
      %p144 = scmp.eq.s32.totalorder %s24, 3
      %p145 = por %p143, %p144
      %p146 = scmp.ne.s32.totalorder %s137, %s138
      %p147 = scmp.eq.s32.totalorder %s24, 0
      %p148 = por %p146, %p147
      %p149 = scmp.ne.s32.totalorder %s137, %s138
      %p150 = scmp.eq.s32.totalorder %s25, 3
      %p151 = por %p149, %p150
      %p153 = scmp.ne.s32.totalorder %s138, %s152
      %p154 = scmp.eq.s32.totalorder %s25, 0
      %p155 = por %p153, %p154
      %s157 = sadd.s32 %s156, 1
      %p160 = scmp.eq.s32.totalorder %s19, 3
      %p161 = scmp.ne.s32.totalorder %s156, %s158
      %p162 = scmp.eq.s32.totalorder %s19, 0
      %p163 = por %p161, %p162
      %p164 = scmp.ne.s32.totalorder %s156, %s158
      %p165 = scmp.eq.s32.totalorder %s24, 3
      %p166 = por %p164, %p165
      %p167 = scmp.ne.s32.totalorder %s158, %s159
      %p168 = scmp.eq.s32.totalorder %s24, 0
      %p169 = por %p167, %p168
      %p170 = scmp.ne.s32.totalorder %s158, %s159
      %p171 = scmp.eq.s32.totalorder %s25, 3
      %p172 = por %p170, %p171
      %p174 = scmp.ne.s32.totalorder %s159, %s173
      %p175 = scmp.eq.s32.totalorder %s25, 0
      %p176 = por %p174, %p175
      %s178 = sadd.s32 %s177, 1
      %p181 = scmp.eq.s32.totalorder %s19, 3
      %p182 = scmp.ne.s32.totalorder %s177, %s179
      %p183 = scmp.eq.s32.totalorder %s19, 0
      %p184 = por %p182, %p183
      %p185 = scmp.ne.s32.totalorder %s177, %s179
      %p186 = scmp.eq.s32.totalorder %s24, 3
      %p187 = por %p185, %p186
      %p188 = scmp.ne.s32.totalorder %s179, %s180
      %p189 = scmp.eq.s32.totalorder %s24, 0
      %p190 = por %p188, %p189
      %p191 = scmp.ne.s32.totalorder %s179, %s180
      %p192 = scmp.eq.s32.totalorder %s25, 3
      %p193 = por %p191, %p192
      %p195 = scmp.ne.s32.totalorder %s180, %s194
      %p196 = scmp.eq.s32.totalorder %s25, 0
      %p197 = por %p195, %p196
      %s198 = ssub.s32 %s26, %s38
      %p199 = scmp.eq.s32.totalorder %s198, 0
      %s201 = sadd.s32 %s200, 1
      %s202 = scalar_select %p199, %s200, %s201
      %p205 = pneg %p199
      %p206 = scmp.eq.s32.totalorder %s19, 3
      %p207 = por %p205, %p206
      %p208 = scmp.ne.s32.totalorder %s200, %s203
      %p209 = scmp.eq.s32.totalorder %s19, 0
      %p210 = por %p208, %p209
      %p211 = scmp.ne.s32.totalorder %s200, %s203
      %p212 = scmp.eq.s32.totalorder %s24, 3
      %p213 = por %p211, %p212
      %p214 = scmp.ne.s32.totalorder %s203, %s204
      %p215 = scmp.eq.s32.totalorder %s24, 0
      %p216 = por %p214, %p215
      %p217 = scmp.ne.s32.totalorder %s203, %s204
      %p218 = scmp.eq.s32.totalorder %s25, 3
      %p219 = por %p217, %p218
      %p221 = scmp.ne.s32.totalorder %s204, %s220
      %p222 = scmp.eq.s32.totalorder %s25, 0
      %p223 = por %p221, %p222
      %p224 = scmp.le.s32.totalorder 1, %s19
      %p225 = scmp.lt.s32.totalorder %s19, 5
      %p226 = pnand %p224, %p225
      %p227 = pneg %p226
      // Predicated region
      $region9: #{cifar_net_forward.1} parent=5 // pred_check
        _
      $region10: #{cifar_net_forward.1} parent=5 // pred_check_branch
        %229 = sbr.rel (%p226) target = $region12
      $region11: #{cifar_net_forward.1} parent=5 // pred_region
        %s230 = ssub.s32 %s19, 1
        // Predicated region
        $region13: #{cifar_net_forward.1} parent=11 // pred_check
          %p231 = pneg %p106
        $region14: #{cifar_net_forward.1} parent=11 // pred_check_branch
          %233 = sbr.rel (%p231) target = $region16
        $region15: #{cifar_net_forward.1} parent=11 // pred_region
          %s235 = ssub.s32 64, 64
          %236 = vsyncadd [#allocation6], %s235
          %s238 = sshll.u32 [#allocation5], 4
          %s239 = int_to_ptr.vmem [resolvable:$true] %s238
          %241 = dma.hbm_to_vmem [thread:$0]  %s2, 64, %s239, [#allocation6]
        $region16: #{cifar_net_forward.1} parent=11 // pred_fallthru
          _
        // Predicated region
        $region17: #{cifar_net_forward.1} parent=11 // pred_check
          %p242 = pneg %p127
        $region18: #{cifar_net_forward.1} parent=11 // pred_check_branch
          %244 = sbr.rel (%p242) target = $region20
        $region19: #{cifar_net_forward.1} parent=11 // pred_region
          %s246 = ssub.s32 4096, 4096
          %247 = vsyncadd [#allocation6], %s246
          %s248 = sshll.u32 [#allocation7], 4
          %s249 = int_to_ptr.vmem [resolvable:$true] %s248
          %254 = dma.hbm_to_vmem [thread:$0]  %s3, 4096, %s249, [#allocation6], 64, 64, 4
        $region20: #{cifar_net_forward.1} parent=11 // pred_fallthru
          _
        // Predicated region
        $region21: #{cifar_net_forward.1} parent=11 // pred_check
          %p255 = pneg %p148
        $region22: #{cifar_net_forward.1} parent=11 // pred_check_branch
          %257 = sbr.rel (%p255) target = $region24
        $region23: #{cifar_net_forward.1} parent=11 // pred_region
          %s259 = ssub.s32 16, 16
          %260 = vsyncadd [#allocation9], %s259
          %s262 = sshll.u32 [#allocation8], 4
          %s263 = int_to_ptr.vmem [resolvable:$true] %s262
          %265 = dma.hbm_to_vmem [thread:$0]  %s4, 16, %s263, [#allocation9]
        $region24: #{cifar_net_forward.1} parent=11 // pred_fallthru
          _
        // Predicated region
        $region25: #{cifar_net_forward.1} parent=11 // pred_check
          %p266 = pneg %p169
        $region26: #{cifar_net_forward.1} parent=11 // pred_check_branch
          %268 = sbr.rel (%p266) target = $region28
        $region27: #{cifar_net_forward.1} parent=11 // pred_region
          %s270 = ssub.s32 1024, 1024
          %271 = vsyncadd [#allocation9], %s270
          %s272 = sshll.u32 [#allocation10], 4
          %s273 = int_to_ptr.vmem [resolvable:$true] %s272
          %278 = dma.hbm_to_vmem [thread:$0]  %s5, 1024, %s273, [#allocation9], 64, 64, 4
        $region28: #{cifar_net_forward.1} parent=11 // pred_fallthru
          _
        // Predicated region
        $region29: #{cifar_net_forward.1} parent=11 // pred_check
          %p279 = pneg %p190
        $region30: #{cifar_net_forward.1} parent=11 // pred_check_branch
          %281 = sbr.rel (%p279) target = $region32
        $region31: #{cifar_net_forward.1} parent=11 // pred_region
          %s283 = ssub.s32 16, 16
          %284 = vsyncadd [#allocation12], %s283
          %s286 = sshll.u32 [#allocation11], 4
          %s287 = int_to_ptr.vmem [resolvable:$true] %s286
          %289 = dma.hbm_to_vmem [thread:$0]  %s6, 16, %s287, [#allocation12]
        $region32: #{cifar_net_forward.1} parent=11 // pred_fallthru
          _
      $region12: #{cifar_net_forward.1} parent=5 // pred_fallthru
        _
      %p290 = scmp.lt.s32.totalorder %s19, 4
      // Predicated region
      $region33: #{cifar_net_forward.1} parent=5 // pred_check
        %p291 = pneg %p290
      $region34: #{cifar_net_forward.1} parent=5 // pred_check_branch
        %293 = sbr.rel (%p291) target = $region36
      $region35: #{cifar_net_forward.1} parent=5 // pred_region
        // Predicated region
        $region37: #{cifar_net_forward.1} parent=35 // pred_check
          %p294 = pneg %p53
        $region38: #{cifar_net_forward.1} parent=35 // pred_check_branch
          %296 = sbr.rel (%p294) target = $region40
        $region39: #{cifar_net_forward.1} parent=35 // pred_region
          %s297 = smul.u32 6, %s27
          %p298 = scmp.lt.s32.totalorder %s26, 0
          %s299 = scalar_select %p298, %s26, 0
          %p300 = scmp.lt.s32.totalorder %s297, 23
          %s301 = scalar_select %p300, %s297, 23
          %s302 = smul.addr %s299, 24
          %s303 = sadd.s32 %s301, %s302
          %s304 = smul.addr %s303, 4
          %s305 = scalar_lea.vmem %s0, %s304
          %s306 = smul.u32 6, %s27
        $region40: #{cifar_net_forward.1} parent=35 // pred_fallthru
          _
        // Predicated region
        $region41: #{cifar_net_forward.1} parent=35 // pred_check
          %p307 = pneg %p79
        $region42: #{cifar_net_forward.1} parent=35 // pred_check_branch
          %309 = sbr.rel (%p307) target = $region44
        $region43: #{cifar_net_forward.1} parent=35 // pred_region
          %s310 = sand.u32 %s69, 1
          %s311 = scalar_lea.sflag [#allocation4], %s310
          %s312 = sand.u32 %s69, 1
          %s313 = smul.addr %s312, 1536
          %s314 = scalar_lea.vmem [#allocation3], %s313
          %s315 = smul.u32 96, %s27
          %s317 = ssub.s32 24576, 24576
          %318 = vsyncadd %s311, %s317
          %s319 = smul.addr %s315, 4
          %s320 = smul.addr %s319, 64
          %s321 = scalar_lea.hbm %s1, %s320
          %s322 = sshll.u32 %s314, 4
          %s323 = int_to_ptr.vmem [resolvable:$true] %s322
          %328 = dma.hbm_to_vmem [thread:$0]  %s321, 24576, %s323, %s311, 256, 256, 16
        $region44: #{cifar_net_forward.1} parent=35 // pred_fallthru
          _
      $region36: #{cifar_net_forward.1} parent=5 // pred_fallthru
        _
      %p329 = scmp.le.s32.totalorder 1, %s19
      %p330 = scmp.lt.s32.totalorder %s19, 5
      %p331 = pnand %p329, %p330
      %p332 = pneg %p331
      // Predicated region
      $region45: #{cifar_net_forward.1} parent=5 // pred_check
        _
      $region46: #{cifar_net_forward.1} parent=5 // pred_check_branch
        %334 = sbr.rel (%p331) target = $region48
      $region47: #{cifar_net_forward.1} parent=5 // pred_region
        %s335 = ssub.s32 %s19, 1
        %s336 = sand.u32 %s72, 1
        %s337 = scalar_lea.sflag [#allocation4], %s336
        %s338 = sand.u32 %s72, 1
        %s339 = smul.addr %s338, 1536
        %s340 = scalar_lea.vmem [#allocation3], %s339
        // Predicated region
        $region49: #{cifar_net_forward.1} parent=47 // pred_check
          %p341 = pneg %p85
        $region50: #{cifar_net_forward.1} parent=47 // pred_check_branch
          %343 = sbr.rel (%p341) target = $region52
        $region51: #{cifar_net_forward.1} parent=47 // pred_region
          %344 = dma.done %s337, 24576
        $region52: #{cifar_net_forward.1} parent=47 // pred_fallthru
          _
        // Predicated region
        $region53: #{cifar_net_forward.1} parent=47 // pred_check
          %p345 = pneg %p106
        $region54: #{cifar_net_forward.1} parent=47 // pred_check_branch
          %347 = sbr.rel (%p345) target = $region56
        $region55: #{cifar_net_forward.1} parent=47 // pred_region
          %348 = dma.done [#allocation6], 64
        $region56: #{cifar_net_forward.1} parent=47 // pred_fallthru
          _
        // Predicated region
        $region57: #{cifar_net_forward.1} parent=47 // pred_check
          %p349 = pneg %p127
        $region58: #{cifar_net_forward.1} parent=47 // pred_check_branch
          %351 = sbr.rel (%p349) target = $region60
        $region59: #{cifar_net_forward.1} parent=47 // pred_region
          %352 = dma.done [#allocation6], 4096
        $region60: #{cifar_net_forward.1} parent=47 // pred_fallthru
          _
        // Predicated region
        $region61: #{cifar_net_forward.1} parent=47 // pred_check
          %p353 = pneg %p148
        $region62: #{cifar_net_forward.1} parent=47 // pred_check_branch
          %355 = sbr.rel (%p353) target = $region64
        $region63: #{cifar_net_forward.1} parent=47 // pred_region
          %356 = dma.done [#allocation9], 16
        $region64: #{cifar_net_forward.1} parent=47 // pred_fallthru
          _
        // Predicated region
        $region65: #{cifar_net_forward.1} parent=47 // pred_check
          %p357 = pneg %p169
        $region66: #{cifar_net_forward.1} parent=47 // pred_check_branch
          %359 = sbr.rel (%p357) target = $region68
        $region67: #{cifar_net_forward.1} parent=47 // pred_region
          %360 = dma.done [#allocation9], 1024
        $region68: #{cifar_net_forward.1} parent=47 // pred_fallthru
          _
        // Predicated region
        $region69: #{cifar_net_forward.1} parent=47 // pred_check
          %p361 = pneg %p190
        $region70: #{cifar_net_forward.1} parent=47 // pred_check_branch
          %363 = sbr.rel (%p361) target = $region72
        $region71: #{cifar_net_forward.1} parent=47 // pred_region
          %364 = dma.done [#allocation12], 16
        $region72: #{cifar_net_forward.1} parent=47 // pred_fallthru
          _
        %s365 = smul.u32 6, %s29
        %p366 = scmp.lt.s32.totalorder %s28, 0
        %s367 = scalar_select %p366, %s28, 0
        %p368 = scmp.lt.s32.totalorder %s365, 23
        %s369 = scalar_select %p368, %s365, 23
        %s370 = smul.addr %s367, 24
        %s371 = sadd.s32 %s369, %s370
        %s372 = smul.addr %s371, 4
        %s373 = scalar_lea.vmem %s0, %s372
        %p374 = pneg %p59
        %p375 = pneg %p56
        %s376 = sand.u32 %s72, 1
        %s377 = scalar_lea.sflag [#allocation4], %s376
        %s378 = sand.u32 %s72, 1
        %s379 = smul.addr %s378, 1536
        %s380 = scalar_lea.vmem [#allocation3], %s379
        %p381 = pneg %p85
        %p382 = pneg %p82
        %p383 = pneg %p106
        %p384 = pneg %p103
        %p385 = pneg %p127
        %p386 = pneg %p124
        %p387 = pneg %p148
        %p388 = pneg %p145
        %p389 = pneg %p169
        %p390 = pneg %p166
        %p391 = pneg %p190
        %p392 = pneg %p187
        %p393 = pneg %p216
        %p394 = pneg %p213
        %p395 = scmp.lt.s32.totalorder %s28, 0
        %s396 = scalar_select %p395, %s28, 0
        %s397 = smul.addr %s396, 8
        %s398 = scalar_lea.vmem %s7, %s397
        %s399 = smul.u32 6, %s29
        %p400 = scmp.lt.s32.totalorder %s28, 0
        %s401 = scalar_select %p400, %s28, 0
        %p402 = scmp.lt.s32.totalorder %s399, 23
        %s403 = scalar_select %p402, %s399, 23
        %s404 = smul.addr %s401, 24
        %s405 = sadd.s32 %s403, %s404
        %s406 = smul.addr %s405, 4
        %s407 = scalar_lea.vmem %s0, %s406
        %s408 = smul.u32 6, %s29
        %s409 = smul.u32 96, %s29
        %p410 = scmp.lt.s32.totalorder %s28, 0
        %s411 = scalar_select %p410, %s28, 0
        %s412 = smul.addr %s411, 8
        %s413 = scalar_lea.vmem %s7, %s412
        %p415 = scmp.eq.s32.totalorder %s29, 0
        // Predicated region
        $region73: #{cifar_net_forward.1} parent=47 // pred_check
          %p416 = pneg %p415
        $region74: #{cifar_net_forward.1} parent=47 // pred_check_branch
          %418 = sbr.rel (%p416) target = $region76
        $region75: #{cifar_net_forward.1} parent=47 // pred_region
          %419 = vst [vmem:[#allocation2] sm:$0xff] 0.0
          %420 = vst [vmem:[#allocation2 + $0x8] sm:$0xff] 0.0
          %421 = vst [vmem:[#allocation2 + $0x10] sm:$0xff] 0.0
          %422 = vst [vmem:[#allocation2 + $0x18] sm:$0xff] 0.0
        $region76: #{cifar_net_forward.1} parent=47 // pred_fallthru
          _
        %v423 = vld [vmem:[#allocation2] sm:$0xff]
        %v424 = vld [vmem:[#allocation2 + $0x8] sm:$0xff]
        %v425 = vld [vmem:[#allocation2 + $0x10] sm:$0xff]
        %v426 = vld [vmem:[#allocation2 + $0x18] sm:$0xff]
        %v427 = vld [vmem:[%s407] sm:$0xff]
        %v428 = vld [vmem:[%s407 + $0x8] sm:$0xff]
        %v429 = vld [vmem:[%s407 + $0x10] sm:$0xff]
        %v430 = vld [vmem:[%s340] sm:$0xff]
        %v431 = vld [vmem:[%s340 + $0x8] sm:$0xff]
        %v432 = vld [vmem:[%s340 + $0x10] sm:$0xff]
        %v433 = vld [vmem:[%s340 + $0x18] sm:$0xff]
        %v434 = vld [vmem:[%s340 + $0x20] sm:$0xff]
        %v435 = vld [vmem:[%s340 + $0x28] sm:$0xff]
        %v436 = vld [vmem:[%s340 + $0x30] sm:$0xff]
        %v437 = vld [vmem:[%s340 + $0x38] sm:$0xff]
        %v438 = vld [vmem:[%s340 + $0x40] sm:$0xff]
        %v439 = vld [vmem:[%s340 + $0x48] sm:$0xff]
        %v440 = vld [vmem:[%s340 + $0x50] sm:$0xff]
        %v441 = vld [vmem:[%s340 + $0x58] sm:$0xff]
        %v442 = vld [vmem:[%s340 + $0x60] sm:$0xff]
        %v443 = vld [vmem:[%s340 + $0x68] sm:$0xff]
        %v444 = vld [vmem:[%s340 + $0x70] sm:$0xff]
        %v445 = vld [vmem:[%s340 + $0x78] sm:$0xff]
        %v446 = vld [vmem:[%s340 + $0x80] sm:$0xff]
        %v447 = vld [vmem:[%s340 + $0x88] sm:$0xff]
        %v448 = vld [vmem:[%s340 + $0x90] sm:$0xff]
        %v449 = vld [vmem:[%s340 + $0x98] sm:$0xff]
        %v450 = vld [vmem:[%s340 + $0xa0] sm:$0xff]
        %v451 = vld [vmem:[%s340 + $0xa8] sm:$0xff]
        %v452 = vld [vmem:[%s340 + $0xb0] sm:$0xff]
        %v453 = vld [vmem:[%s340 + $0xb8] sm:$0xff]
        %v454 = vld [vmem:[%s340 + $0xc0] sm:$0xff]
        %v455 = vld [vmem:[%s340 + $0xc8] sm:$0xff]
        %v456 = vld [vmem:[%s340 + $0xd0] sm:$0xff]
        %v457 = vld [vmem:[%s340 + $0xd8] sm:$0xff]
        %v458 = vld [vmem:[%s340 + $0xe0] sm:$0xff]
        %v459 = vld [vmem:[%s340 + $0xe8] sm:$0xff]
        %v460 = vld [vmem:[%s340 + $0xf0] sm:$0xff]
        %v461 = vld [vmem:[%s340 + $0xf8] sm:$0xff]
        %v462 = vld [vmem:[%s340 + $0x100] sm:$0xff]
        %v463 = vld [vmem:[%s340 + $0x108] sm:$0xff]
        %v464 = vld [vmem:[%s340 + $0x110] sm:$0xff]
        %v465 = vld [vmem:[%s340 + $0x118] sm:$0xff]
        %v466 = vld [vmem:[%s340 + $0x120] sm:$0xff]
        %v467 = vld [vmem:[%s340 + $0x128] sm:$0xff]
        %v468 = vld [vmem:[%s340 + $0x130] sm:$0xff]
        %v469 = vld [vmem:[%s340 + $0x138] sm:$0xff]
        %v470 = vld [vmem:[%s340 + $0x140] sm:$0xff]
        %v471 = vld [vmem:[%s340 + $0x148] sm:$0xff]
        %v472 = vld [vmem:[%s340 + $0x150] sm:$0xff]
        %v473 = vld [vmem:[%s340 + $0x158] sm:$0xff]
        %v474 = vld [vmem:[%s340 + $0x160] sm:$0xff]
        %v475 = vld [vmem:[%s340 + $0x168] sm:$0xff]
        %v476 = vld [vmem:[%s340 + $0x170] sm:$0xff]
        %v477 = vld [vmem:[%s340 + $0x178] sm:$0xff]
        %v478 = vld [vmem:[%s340 + $0x180] sm:$0xff]
        %v479 = vld [vmem:[%s340 + $0x188] sm:$0xff]
        %v480 = vld [vmem:[%s340 + $0x190] sm:$0xff]
        %v481 = vld [vmem:[%s340 + $0x198] sm:$0xff]
        %v482 = vld [vmem:[%s340 + $0x1a0] sm:$0xff]
        %v483 = vld [vmem:[%s340 + $0x1a8] sm:$0xff]
        %v484 = vld [vmem:[%s340 + $0x1b0] sm:$0xff]
        %v485 = vld [vmem:[%s340 + $0x1b8] sm:$0xff]
        %v486 = vld [vmem:[%s340 + $0x1c0] sm:$0xff]
        %v487 = vld [vmem:[%s340 + $0x1c8] sm:$0xff]
        %v488 = vld [vmem:[%s340 + $0x1d0] sm:$0xff]
        %v489 = vld [vmem:[%s340 + $0x1d8] sm:$0xff]
        %v490 = vld [vmem:[%s340 + $0x1e0] sm:$0xff]
        %v491 = vld [vmem:[%s340 + $0x1e8] sm:$0xff]
        %v492 = vld [vmem:[%s340 + $0x1f0] sm:$0xff]
        %v493 = vld [vmem:[%s340 + $0x1f8] sm:$0xff]
        %v494 = vld [vmem:[%s340 + $0x200] sm:$0xff]
        %v495 = vld [vmem:[%s340 + $0x208] sm:$0xff]
        %v496 = vld [vmem:[%s340 + $0x210] sm:$0xff]
        %v497 = vld [vmem:[%s340 + $0x218] sm:$0xff]
        %v498 = vld [vmem:[%s340 + $0x220] sm:$0xff]
        %v499 = vld [vmem:[%s340 + $0x228] sm:$0xff]
        %v500 = vld [vmem:[%s340 + $0x230] sm:$0xff]
        %v501 = vld [vmem:[%s340 + $0x238] sm:$0xff]
        %v502 = vld [vmem:[%s340 + $0x240] sm:$0xff]
        %v503 = vld [vmem:[%s340 + $0x248] sm:$0xff]
        %v504 = vld [vmem:[%s340 + $0x250] sm:$0xff]
        %v505 = vld [vmem:[%s340 + $0x258] sm:$0xff]
        %v506 = vld [vmem:[%s340 + $0x260] sm:$0xff]
        %v507 = vld [vmem:[%s340 + $0x268] sm:$0xff]
        %v508 = vld [vmem:[%s340 + $0x270] sm:$0xff]
        %v509 = vld [vmem:[%s340 + $0x278] sm:$0xff]
        %v510 = vld [vmem:[%s340 + $0x280] sm:$0xff]
        %v511 = vld [vmem:[%s340 + $0x288] sm:$0xff]
        %v512 = vld [vmem:[%s340 + $0x290] sm:$0xff]
        %v513 = vld [vmem:[%s340 + $0x298] sm:$0xff]
        %v514 = vld [vmem:[%s340 + $0x2a0] sm:$0xff]
        %v515 = vld [vmem:[%s340 + $0x2a8] sm:$0xff]
        %v516 = vld [vmem:[%s340 + $0x2b0] sm:$0xff]
        %v517 = vld [vmem:[%s340 + $0x2b8] sm:$0xff]
        %v518 = vld [vmem:[%s340 + $0x2c0] sm:$0xff]
        %v519 = vld [vmem:[%s340 + $0x2c8] sm:$0xff]
        %v520 = vld [vmem:[%s340 + $0x2d0] sm:$0xff]
        %v521 = vld [vmem:[%s340 + $0x2d8] sm:$0xff]
        %v522 = vld [vmem:[%s340 + $0x2e0] sm:$0xff]
        %v523 = vld [vmem:[%s340 + $0x2e8] sm:$0xff]
        %v524 = vld [vmem:[%s340 + $0x2f0] sm:$0xff]
        %v525 = vld [vmem:[%s340 + $0x2f8] sm:$0xff]
        %v526 = vld [vmem:[%s340 + $0x300] sm:$0xff]
        %v527 = vld [vmem:[%s340 + $0x308] sm:$0xff]
        %v528 = vld [vmem:[%s340 + $0x310] sm:$0xff]
        %v529 = vld [vmem:[%s340 + $0x318] sm:$0xff]
        %v530 = vld [vmem:[%s340 + $0x320] sm:$0xff]
        %v531 = vld [vmem:[%s340 + $0x328] sm:$0xff]
        %v532 = vld [vmem:[%s340 + $0x330] sm:$0xff]
        %v533 = vld [vmem:[%s340 + $0x338] sm:$0xff]
        %v534 = vld [vmem:[%s340 + $0x340] sm:$0xff]
        %v535 = vld [vmem:[%s340 + $0x348] sm:$0xff]
        %v536 = vld [vmem:[%s340 + $0x350] sm:$0xff]
        %v537 = vld [vmem:[%s340 + $0x358] sm:$0xff]
        %v538 = vld [vmem:[%s340 + $0x360] sm:$0xff]
        %v539 = vld [vmem:[%s340 + $0x368] sm:$0xff]
        %v540 = vld [vmem:[%s340 + $0x370] sm:$0xff]
        %v541 = vld [vmem:[%s340 + $0x378] sm:$0xff]
        %v542 = vld [vmem:[%s340 + $0x380] sm:$0xff]
        %v543 = vld [vmem:[%s340 + $0x388] sm:$0xff]
        %v544 = vld [vmem:[%s340 + $0x390] sm:$0xff]
        %v545 = vld [vmem:[%s340 + $0x398] sm:$0xff]
        %v546 = vld [vmem:[%s340 + $0x3a0] sm:$0xff]
        %v547 = vld [vmem:[%s340 + $0x3a8] sm:$0xff]
        %v548 = vld [vmem:[%s340 + $0x3b0] sm:$0xff]
        %v549 = vld [vmem:[%s340 + $0x3b8] sm:$0xff]
        %v550 = vld [vmem:[%s340 + $0x3c0] sm:$0xff]
        %v551 = vld [vmem:[%s340 + $0x3c8] sm:$0xff]
        %v552 = vld [vmem:[%s340 + $0x3d0] sm:$0xff]
        %v553 = vld [vmem:[%s340 + $0x3d8] sm:$0xff]
        %v554 = vld [vmem:[%s340 + $0x3e0] sm:$0xff]
        %v555 = vld [vmem:[%s340 + $0x3e8] sm:$0xff]
        %v556 = vld [vmem:[%s340 + $0x3f0] sm:$0xff]
        %v557 = vld [vmem:[%s340 + $0x3f8] sm:$0xff]
        %v558 = vld [vmem:[%s340 + $0x400] sm:$0xff]
        %v559 = vld [vmem:[%s340 + $0x408] sm:$0xff]
        %v560 = vld [vmem:[%s340 + $0x410] sm:$0xff]
        %v561 = vld [vmem:[%s340 + $0x418] sm:$0xff]
        %v562 = vld [vmem:[%s340 + $0x420] sm:$0xff]
        %v563 = vld [vmem:[%s340 + $0x428] sm:$0xff]
        %v564 = vld [vmem:[%s340 + $0x430] sm:$0xff]
        %v565 = vld [vmem:[%s340 + $0x438] sm:$0xff]
        %v566 = vld [vmem:[%s340 + $0x440] sm:$0xff]
        %v567 = vld [vmem:[%s340 + $0x448] sm:$0xff]
        %v568 = vld [vmem:[%s340 + $0x450] sm:$0xff]
        %v569 = vld [vmem:[%s340 + $0x458] sm:$0xff]
        %v570 = vld [vmem:[%s340 + $0x460] sm:$0xff]
        %v571 = vld [vmem:[%s340 + $0x468] sm:$0xff]
        %v572 = vld [vmem:[%s340 + $0x470] sm:$0xff]
        %v573 = vld [vmem:[%s340 + $0x478] sm:$0xff]
        %v574 = vld [vmem:[%s340 + $0x480] sm:$0xff]
        %v575 = vld [vmem:[%s340 + $0x488] sm:$0xff]
        %v576 = vld [vmem:[%s340 + $0x490] sm:$0xff]
        %v577 = vld [vmem:[%s340 + $0x498] sm:$0xff]
        %v578 = vld [vmem:[%s340 + $0x4a0] sm:$0xff]
        %v579 = vld [vmem:[%s340 + $0x4a8] sm:$0xff]
        %v580 = vld [vmem:[%s340 + $0x4b0] sm:$0xff]
        %v581 = vld [vmem:[%s340 + $0x4b8] sm:$0xff]
        %v582 = vld [vmem:[%s340 + $0x4c0] sm:$0xff]
        %v583 = vld [vmem:[%s340 + $0x4c8] sm:$0xff]
        %v584 = vld [vmem:[%s340 + $0x4d0] sm:$0xff]
        %v585 = vld [vmem:[%s340 + $0x4d8] sm:$0xff]
        %v586 = vld [vmem:[%s340 + $0x4e0] sm:$0xff]
        %v587 = vld [vmem:[%s340 + $0x4e8] sm:$0xff]
        %v588 = vld [vmem:[%s340 + $0x4f0] sm:$0xff]
        %v589 = vld [vmem:[%s340 + $0x4f8] sm:$0xff]
        %v590 = vld [vmem:[%s340 + $0x500] sm:$0xff]
        %v591 = vld [vmem:[%s340 + $0x508] sm:$0xff]
        %v592 = vld [vmem:[%s340 + $0x510] sm:$0xff]
        %v593 = vld [vmem:[%s340 + $0x518] sm:$0xff]
        %v594 = vld [vmem:[%s340 + $0x520] sm:$0xff]
        %v595 = vld [vmem:[%s340 + $0x528] sm:$0xff]
        %v596 = vld [vmem:[%s340 + $0x530] sm:$0xff]
        %v597 = vld [vmem:[%s340 + $0x538] sm:$0xff]
        %v598 = vld [vmem:[%s340 + $0x540] sm:$0xff]
        %v599 = vld [vmem:[%s340 + $0x548] sm:$0xff]
        %v600 = vld [vmem:[%s340 + $0x550] sm:$0xff]
        %v601 = vld [vmem:[%s340 + $0x558] sm:$0xff]
        %v602 = vld [vmem:[%s340 + $0x560] sm:$0xff]
        %v603 = vld [vmem:[%s340 + $0x568] sm:$0xff]
        %v604 = vld [vmem:[%s340 + $0x570] sm:$0xff]
        %v605 = vld [vmem:[%s340 + $0x578] sm:$0xff]
        %v606 = vld [vmem:[%s340 + $0x580] sm:$0xff]
        %v607 = vld [vmem:[%s340 + $0x588] sm:$0xff]
        %v608 = vld [vmem:[%s340 + $0x590] sm:$0xff]
        %v609 = vld [vmem:[%s340 + $0x598] sm:$0xff]
        %v610 = vld [vmem:[%s340 + $0x5a0] sm:$0xff]
        %v611 = vld [vmem:[%s340 + $0x5a8] sm:$0xff]
        %v612 = vld [vmem:[%s340 + $0x5b0] sm:$0xff]
        %v613 = vld [vmem:[%s340 + $0x5b8] sm:$0xff]
        %v614 = vld [vmem:[%s340 + $0x5c0] sm:$0xff]
        %v615 = vld [vmem:[%s340 + $0x5c8] sm:$0xff]
        %v616 = vld [vmem:[%s340 + $0x5d0] sm:$0xff]
        %v617 = vld [vmem:[%s340 + $0x5d8] sm:$0xff]
        %v618 = vld [vmem:[%s340 + $0x5e0] sm:$0xff]
        %v619 = vld [vmem:[%s340 + $0x5e8] sm:$0xff]
        %v620 = vld [vmem:[%s340 + $0x5f0] sm:$0xff]
        %v621 = vld [vmem:[%s340 + $0x5f8] sm:$0xff]
        %v625 = vunpack.c.l.b16 %v427
        %v626 = vunpack.c.h.b16 %v427
        %v627 = vunpack.c.l.b16 %v428
        %v628 = vunpack.c.h.b16 %v428
        %v629 = vunpack.c.l.b16 %v429
        %v630 = vunpack.c.h.b16 %v429
        %v631 = vpack.c.b16 %v625, %v625
        %v632 = vpack.c.b16 %v626, %v626
        %v633 = vpack.c.b16 %v627, %v627
        %v634 = vpack.c.b16 %v628, %v628
        %v635 = vpack.c.b16 %v629, %v629
        %v636 = vpack.c.b16 %v630, %v630
        %v835 = vunpack.c.l.b16 %v430
        %v836 = vunpack.c.h.b16 %v430
        %v837 = vunpack.c.l.b16 %v431
        %v838 = vunpack.c.h.b16 %v431
        %v839 = vunpack.c.l.b16 %v432
        %v840 = vunpack.c.h.b16 %v432
        %v841 = vunpack.c.l.b16 %v433
        %v842 = vunpack.c.h.b16 %v433
        %v843 = vunpack.c.l.b16 %v434
        %v844 = vunpack.c.h.b16 %v434
        %v845 = vunpack.c.l.b16 %v435
        %v846 = vunpack.c.h.b16 %v435
        %v847 = vunpack.c.l.b16 %v436
        %v848 = vunpack.c.h.b16 %v436
        %v849 = vunpack.c.l.b16 %v437
        %v850 = vunpack.c.h.b16 %v437
        %v851 = vunpack.c.l.b16 %v438
        %v852 = vunpack.c.h.b16 %v438
        %v853 = vunpack.c.l.b16 %v439
        %v854 = vunpack.c.h.b16 %v439
        %v855 = vunpack.c.l.b16 %v440
        %v856 = vunpack.c.h.b16 %v440
        %v857 = vunpack.c.l.b16 %v441
        %v858 = vunpack.c.h.b16 %v441
        %v859 = vunpack.c.l.b16 %v442
        %v860 = vunpack.c.h.b16 %v442
        %v861 = vunpack.c.l.b16 %v443
        %v862 = vunpack.c.h.b16 %v443
        %v863 = vunpack.c.l.b16 %v444
        %v864 = vunpack.c.h.b16 %v444
        %v865 = vunpack.c.l.b16 %v445
        %v866 = vunpack.c.h.b16 %v445
        %v867 = vunpack.c.l.b16 %v446
        %v868 = vunpack.c.h.b16 %v446
        %v869 = vunpack.c.l.b16 %v447
        %v870 = vunpack.c.h.b16 %v447
        %v871 = vunpack.c.l.b16 %v448
        %v872 = vunpack.c.h.b16 %v448
        %v873 = vunpack.c.l.b16 %v449
        %v874 = vunpack.c.h.b16 %v449
        %v875 = vunpack.c.l.b16 %v450
        %v876 = vunpack.c.h.b16 %v450
        %v877 = vunpack.c.l.b16 %v451
        %v878 = vunpack.c.h.b16 %v451
        %v879 = vunpack.c.l.b16 %v452
        %v880 = vunpack.c.h.b16 %v452
        %v881 = vunpack.c.l.b16 %v453
        %v882 = vunpack.c.h.b16 %v453
        %v883 = vunpack.c.l.b16 %v454
        %v884 = vunpack.c.h.b16 %v454
        %v885 = vunpack.c.l.b16 %v455
        %v886 = vunpack.c.h.b16 %v455
        %v887 = vunpack.c.l.b16 %v456
        %v888 = vunpack.c.h.b16 %v456
        %v889 = vunpack.c.l.b16 %v457
        %v890 = vunpack.c.h.b16 %v457
        %v891 = vunpack.c.l.b16 %v458
        %v892 = vunpack.c.h.b16 %v458
        %v893 = vunpack.c.l.b16 %v459
        %v894 = vunpack.c.h.b16 %v459
        %v895 = vunpack.c.l.b16 %v460
        %v896 = vunpack.c.h.b16 %v460
        %v897 = vunpack.c.l.b16 %v461
        %v898 = vunpack.c.h.b16 %v461
        %v899 = vunpack.c.l.b16 %v462
        %v900 = vunpack.c.h.b16 %v462
        %v901 = vunpack.c.l.b16 %v463
        %v902 = vunpack.c.h.b16 %v463
        %v903 = vunpack.c.l.b16 %v464
        %v904 = vunpack.c.h.b16 %v464
        %v905 = vunpack.c.l.b16 %v465
        %v906 = vunpack.c.h.b16 %v465
        %v907 = vunpack.c.l.b16 %v466
        %v908 = vunpack.c.h.b16 %v466
        %v909 = vunpack.c.l.b16 %v467
        %v910 = vunpack.c.h.b16 %v467
        %v911 = vunpack.c.l.b16 %v468
        %v912 = vunpack.c.h.b16 %v468
        %v913 = vunpack.c.l.b16 %v469
        %v914 = vunpack.c.h.b16 %v469
        %v915 = vunpack.c.l.b16 %v470
        %v916 = vunpack.c.h.b16 %v470
        %v917 = vunpack.c.l.b16 %v471
        %v918 = vunpack.c.h.b16 %v471
        %v919 = vunpack.c.l.b16 %v472
        %v920 = vunpack.c.h.b16 %v472
        %v921 = vunpack.c.l.b16 %v473
        %v922 = vunpack.c.h.b16 %v473
        %v923 = vunpack.c.l.b16 %v474
        %v924 = vunpack.c.h.b16 %v474
        %v925 = vunpack.c.l.b16 %v475
        %v926 = vunpack.c.h.b16 %v475
        %v927 = vunpack.c.l.b16 %v476
        %v928 = vunpack.c.h.b16 %v476
        %v929 = vunpack.c.l.b16 %v477
        %v930 = vunpack.c.h.b16 %v477
        %v931 = vunpack.c.l.b16 %v478
        %v932 = vunpack.c.h.b16 %v478
        %v933 = vunpack.c.l.b16 %v479
        %v934 = vunpack.c.h.b16 %v479
        %v935 = vunpack.c.l.b16 %v480
        %v936 = vunpack.c.h.b16 %v480
        %v937 = vunpack.c.l.b16 %v481
        %v938 = vunpack.c.h.b16 %v481
        %v939 = vunpack.c.l.b16 %v482
        %v940 = vunpack.c.h.b16 %v482
        %v941 = vunpack.c.l.b16 %v483
        %v942 = vunpack.c.h.b16 %v483
        %v943 = vunpack.c.l.b16 %v484
        %v944 = vunpack.c.h.b16 %v484
        %v945 = vunpack.c.l.b16 %v485
        %v946 = vunpack.c.h.b16 %v485
        %v947 = vunpack.c.l.b16 %v486
        %v948 = vunpack.c.h.b16 %v486
        %v949 = vunpack.c.l.b16 %v487
        %v950 = vunpack.c.h.b16 %v487
        %v951 = vunpack.c.l.b16 %v488
        %v952 = vunpack.c.h.b16 %v488
        %v953 = vunpack.c.l.b16 %v489
        %v954 = vunpack.c.h.b16 %v489
        %v955 = vunpack.c.l.b16 %v490
        %v956 = vunpack.c.h.b16 %v490
        %v957 = vunpack.c.l.b16 %v491
        %v958 = vunpack.c.h.b16 %v491
        %v959 = vunpack.c.l.b16 %v492
        %v960 = vunpack.c.h.b16 %v492
        %v961 = vunpack.c.l.b16 %v493
        %v962 = vunpack.c.h.b16 %v493
        %v963 = vunpack.c.l.b16 %v494
        %v964 = vunpack.c.h.b16 %v494
        %v965 = vunpack.c.l.b16 %v495
        %v966 = vunpack.c.h.b16 %v495
        %v967 = vunpack.c.l.b16 %v496
        %v968 = vunpack.c.h.b16 %v496
        %v969 = vunpack.c.l.b16 %v497
        %v970 = vunpack.c.h.b16 %v497
        %v971 = vunpack.c.l.b16 %v498
        %v972 = vunpack.c.h.b16 %v498
        %v973 = vunpack.c.l.b16 %v499
        %v974 = vunpack.c.h.b16 %v499
        %v975 = vunpack.c.l.b16 %v500
        %v976 = vunpack.c.h.b16 %v500
        %v977 = vunpack.c.l.b16 %v501
        %v978 = vunpack.c.h.b16 %v501
        %v979 = vunpack.c.l.b16 %v502
        %v980 = vunpack.c.h.b16 %v502
        %v981 = vunpack.c.l.b16 %v503
        %v982 = vunpack.c.h.b16 %v503
        %v983 = vunpack.c.l.b16 %v504
        %v984 = vunpack.c.h.b16 %v504
        %v985 = vunpack.c.l.b16 %v505
        %v986 = vunpack.c.h.b16 %v505
        %v987 = vunpack.c.l.b16 %v506
        %v988 = vunpack.c.h.b16 %v506
        %v989 = vunpack.c.l.b16 %v507
        %v990 = vunpack.c.h.b16 %v507
        %v991 = vunpack.c.l.b16 %v508
        %v992 = vunpack.c.h.b16 %v508
        %v993 = vunpack.c.l.b16 %v509
        %v994 = vunpack.c.h.b16 %v509
        %v995 = vunpack.c.l.b16 %v510
        %v996 = vunpack.c.h.b16 %v510
        %v997 = vunpack.c.l.b16 %v511
        %v998 = vunpack.c.h.b16 %v511
        %v999 = vunpack.c.l.b16 %v512
        %v1000 = vunpack.c.h.b16 %v512
        %v1001 = vunpack.c.l.b16 %v513
        %v1002 = vunpack.c.h.b16 %v513
        %v1003 = vunpack.c.l.b16 %v514
        %v1004 = vunpack.c.h.b16 %v514
        %v1005 = vunpack.c.l.b16 %v515
        %v1006 = vunpack.c.h.b16 %v515
        %v1007 = vunpack.c.l.b16 %v516
        %v1008 = vunpack.c.h.b16 %v516
        %v1009 = vunpack.c.l.b16 %v517
        %v1010 = vunpack.c.h.b16 %v517
        %v1011 = vunpack.c.l.b16 %v518
        %v1012 = vunpack.c.h.b16 %v518
        %v1013 = vunpack.c.l.b16 %v519
        %v1014 = vunpack.c.h.b16 %v519
        %v1015 = vunpack.c.l.b16 %v520
        %v1016 = vunpack.c.h.b16 %v520
        %v1017 = vunpack.c.l.b16 %v521
        %v1018 = vunpack.c.h.b16 %v521
        %v1019 = vunpack.c.l.b16 %v522
        %v1020 = vunpack.c.h.b16 %v522
        %v1021 = vunpack.c.l.b16 %v523
        %v1022 = vunpack.c.h.b16 %v523
        %v1023 = vunpack.c.l.b16 %v524
        %v1024 = vunpack.c.h.b16 %v524
        %v1025 = vunpack.c.l.b16 %v525
        %v1026 = vunpack.c.h.b16 %v525
        %v1027 = vunpack.c.l.b16 %v526
        %v1028 = vunpack.c.h.b16 %v526
        %v1029 = vunpack.c.l.b16 %v527
        %v1030 = vunpack.c.h.b16 %v527
        %v1031 = vunpack.c.l.b16 %v528
        %v1032 = vunpack.c.h.b16 %v528
        %v1033 = vunpack.c.l.b16 %v529
        %v1034 = vunpack.c.h.b16 %v529
        %v1035 = vunpack.c.l.b16 %v530
        %v1036 = vunpack.c.h.b16 %v530
        %v1037 = vunpack.c.l.b16 %v531
        %v1038 = vunpack.c.h.b16 %v531
        %v1039 = vunpack.c.l.b16 %v532
        %v1040 = vunpack.c.h.b16 %v532
        %v1041 = vunpack.c.l.b16 %v533
        %v1042 = vunpack.c.h.b16 %v533
        %v1043 = vunpack.c.l.b16 %v534
        %v1044 = vunpack.c.h.b16 %v534
        %v1045 = vunpack.c.l.b16 %v535
        %v1046 = vunpack.c.h.b16 %v535
        %v1047 = vunpack.c.l.b16 %v536
        %v1048 = vunpack.c.h.b16 %v536
        %v1049 = vunpack.c.l.b16 %v537
        %v1050 = vunpack.c.h.b16 %v537
        %v1051 = vunpack.c.l.b16 %v538
        %v1052 = vunpack.c.h.b16 %v538
        %v1053 = vunpack.c.l.b16 %v539
        %v1054 = vunpack.c.h.b16 %v539
        %v1055 = vunpack.c.l.b16 %v540
        %v1056 = vunpack.c.h.b16 %v540
        %v1057 = vunpack.c.l.b16 %v541
        %v1058 = vunpack.c.h.b16 %v541
        %v1059 = vunpack.c.l.b16 %v542
        %v1060 = vunpack.c.h.b16 %v542
        %v1061 = vunpack.c.l.b16 %v543
        %v1062 = vunpack.c.h.b16 %v543
        %v1063 = vunpack.c.l.b16 %v544
        %v1064 = vunpack.c.h.b16 %v544
        %v1065 = vunpack.c.l.b16 %v545
        %v1066 = vunpack.c.h.b16 %v545
        %v1067 = vunpack.c.l.b16 %v546
        %v1068 = vunpack.c.h.b16 %v546
        %v1069 = vunpack.c.l.b16 %v547
        %v1070 = vunpack.c.h.b16 %v547
        %v1071 = vunpack.c.l.b16 %v548
        %v1072 = vunpack.c.h.b16 %v548
        %v1073 = vunpack.c.l.b16 %v549
        %v1074 = vunpack.c.h.b16 %v549
        %v1075 = vunpack.c.l.b16 %v550
        %v1076 = vunpack.c.h.b16 %v550
        %v1077 = vunpack.c.l.b16 %v551
        %v1078 = vunpack.c.h.b16 %v551
        %v1079 = vunpack.c.l.b16 %v552
        %v1080 = vunpack.c.h.b16 %v552
        %v1081 = vunpack.c.l.b16 %v553
        %v1082 = vunpack.c.h.b16 %v553
        %v1083 = vunpack.c.l.b16 %v554
        %v1084 = vunpack.c.h.b16 %v554
        %v1085 = vunpack.c.l.b16 %v555
        %v1086 = vunpack.c.h.b16 %v555
        %v1087 = vunpack.c.l.b16 %v556
        %v1088 = vunpack.c.h.b16 %v556
        %v1089 = vunpack.c.l.b16 %v557
        %v1090 = vunpack.c.h.b16 %v557
        %v1091 = vunpack.c.l.b16 %v558
        %v1092 = vunpack.c.h.b16 %v558
        %v1093 = vunpack.c.l.b16 %v559
        %v1094 = vunpack.c.h.b16 %v559
        %v1095 = vunpack.c.l.b16 %v560
        %v1096 = vunpack.c.h.b16 %v560
        %v1097 = vunpack.c.l.b16 %v561
        %v1098 = vunpack.c.h.b16 %v561
        %v1099 = vunpack.c.l.b16 %v562
        %v1100 = vunpack.c.h.b16 %v562
        %v1101 = vunpack.c.l.b16 %v563
        %v1102 = vunpack.c.h.b16 %v563
        %v1103 = vunpack.c.l.b16 %v564
        %v1104 = vunpack.c.h.b16 %v564
        %v1105 = vunpack.c.l.b16 %v565
        %v1106 = vunpack.c.h.b16 %v565
        %v1107 = vunpack.c.l.b16 %v566
        %v1108 = vunpack.c.h.b16 %v566
        %v1109 = vunpack.c.l.b16 %v567
        %v1110 = vunpack.c.h.b16 %v567
        %v1111 = vunpack.c.l.b16 %v568
        %v1112 = vunpack.c.h.b16 %v568
        %v1113 = vunpack.c.l.b16 %v569
        %v1114 = vunpack.c.h.b16 %v569
        %v1115 = vunpack.c.l.b16 %v570
        %v1116 = vunpack.c.h.b16 %v570
        %v1117 = vunpack.c.l.b16 %v571
        %v1118 = vunpack.c.h.b16 %v571
        %v1119 = vunpack.c.l.b16 %v572
        %v1120 = vunpack.c.h.b16 %v572
        %v1121 = vunpack.c.l.b16 %v573
        %v1122 = vunpack.c.h.b16 %v573
        %v1123 = vunpack.c.l.b16 %v574
        %v1124 = vunpack.c.h.b16 %v574
        %v1125 = vunpack.c.l.b16 %v575
        %v1126 = vunpack.c.h.b16 %v575
        %v1127 = vunpack.c.l.b16 %v576
        %v1128 = vunpack.c.h.b16 %v576
        %v1129 = vunpack.c.l.b16 %v577
        %v1130 = vunpack.c.h.b16 %v577
        %v1131 = vunpack.c.l.b16 %v578
        %v1132 = vunpack.c.h.b16 %v578
        %v1133 = vunpack.c.l.b16 %v579
        %v1134 = vunpack.c.h.b16 %v579
        %v1135 = vunpack.c.l.b16 %v580
        %v1136 = vunpack.c.h.b16 %v580
        %v1137 = vunpack.c.l.b16 %v581
        %v1138 = vunpack.c.h.b16 %v581
        %v1139 = vunpack.c.l.b16 %v582
        %v1140 = vunpack.c.h.b16 %v582
        %v1141 = vunpack.c.l.b16 %v583
        %v1142 = vunpack.c.h.b16 %v583
        %v1143 = vunpack.c.l.b16 %v584
        %v1144 = vunpack.c.h.b16 %v584
        %v1145 = vunpack.c.l.b16 %v585
        %v1146 = vunpack.c.h.b16 %v585
        %v1147 = vunpack.c.l.b16 %v586
        %v1148 = vunpack.c.h.b16 %v586
        %v1149 = vunpack.c.l.b16 %v587
        %v1150 = vunpack.c.h.b16 %v587
        %v1151 = vunpack.c.l.b16 %v588
        %v1152 = vunpack.c.h.b16 %v588
        %v1153 = vunpack.c.l.b16 %v589
        %v1154 = vunpack.c.h.b16 %v589
        %v1155 = vunpack.c.l.b16 %v590
        %v1156 = vunpack.c.h.b16 %v590
        %v1157 = vunpack.c.l.b16 %v591
        %v1158 = vunpack.c.h.b16 %v591
        %v1159 = vunpack.c.l.b16 %v592
        %v1160 = vunpack.c.h.b16 %v592
        %v1161 = vunpack.c.l.b16 %v593
        %v1162 = vunpack.c.h.b16 %v593
        %v1163 = vunpack.c.l.b16 %v594
        %v1164 = vunpack.c.h.b16 %v594
        %v1165 = vunpack.c.l.b16 %v595
        %v1166 = vunpack.c.h.b16 %v595
        %v1167 = vunpack.c.l.b16 %v596
        %v1168 = vunpack.c.h.b16 %v596
        %v1169 = vunpack.c.l.b16 %v597
        %v1170 = vunpack.c.h.b16 %v597
        %v1171 = vunpack.c.l.b16 %v598
        %v1172 = vunpack.c.h.b16 %v598
        %v1173 = vunpack.c.l.b16 %v599
        %v1174 = vunpack.c.h.b16 %v599
        %v1175 = vunpack.c.l.b16 %v600
        %v1176 = vunpack.c.h.b16 %v600
        %v1177 = vunpack.c.l.b16 %v601
        %v1178 = vunpack.c.h.b16 %v601
        %v1179 = vunpack.c.l.b16 %v602
        %v1180 = vunpack.c.h.b16 %v602
        %v1181 = vunpack.c.l.b16 %v603
        %v1182 = vunpack.c.h.b16 %v603
        %v1183 = vunpack.c.l.b16 %v604
        %v1184 = vunpack.c.h.b16 %v604
        %v1185 = vunpack.c.l.b16 %v605
        %v1186 = vunpack.c.h.b16 %v605
        %v1187 = vunpack.c.l.b16 %v606
        %v1188 = vunpack.c.h.b16 %v606
        %v1189 = vunpack.c.l.b16 %v607
        %v1190 = vunpack.c.h.b16 %v607
        %v1191 = vunpack.c.l.b16 %v608
        %v1192 = vunpack.c.h.b16 %v608
        %v1193 = vunpack.c.l.b16 %v609
        %v1194 = vunpack.c.h.b16 %v609
        %v1195 = vunpack.c.l.b16 %v610
        %v1196 = vunpack.c.h.b16 %v610
        %v1197 = vunpack.c.l.b16 %v611
        %v1198 = vunpack.c.h.b16 %v611
        %v1199 = vunpack.c.l.b16 %v612
        %v1200 = vunpack.c.h.b16 %v612
        %v1201 = vunpack.c.l.b16 %v613
        %v1202 = vunpack.c.h.b16 %v613
        %v1203 = vunpack.c.l.b16 %v614
        %v1204 = vunpack.c.h.b16 %v614
        %v1205 = vunpack.c.l.b16 %v615
        %v1206 = vunpack.c.h.b16 %v615
        %v1207 = vunpack.c.l.b16 %v616
        %v1208 = vunpack.c.h.b16 %v616
        %v1209 = vunpack.c.l.b16 %v617
        %v1210 = vunpack.c.h.b16 %v617
        %v1211 = vunpack.c.l.b16 %v618
        %v1212 = vunpack.c.h.b16 %v618
        %v1213 = vunpack.c.l.b16 %v619
        %v1214 = vunpack.c.h.b16 %v619
        %v1215 = vunpack.c.l.b16 %v620
        %v1216 = vunpack.c.h.b16 %v620
        %v1217 = vunpack.c.l.b16 %v621
        %v1218 = vunpack.c.h.b16 %v621
        %v1219 = vpack.c.b16 %v839, %v835
        %v1220 = vpack.c.b16 %v840, %v836
        %v1221 = vpack.c.b16 %v841, %v837
        %v1222 = vpack.c.b16 %v842, %v838
        %v1223 = vpack.c.b16 %v847, %v843
        %v1224 = vpack.c.b16 %v848, %v844
        %v1225 = vpack.c.b16 %v849, %v845
        %v1226 = vpack.c.b16 %v850, %v846
        %v1227 = vpack.c.b16 %v855, %v851
        %v1228 = vpack.c.b16 %v856, %v852
        %v1229 = vpack.c.b16 %v857, %v853
        %v1230 = vpack.c.b16 %v858, %v854
        %v1231 = vpack.c.b16 %v863, %v859
        %v1232 = vpack.c.b16 %v864, %v860
        %v1233 = vpack.c.b16 %v865, %v861
        %v1234 = vpack.c.b16 %v866, %v862
        %v1235 = vpack.c.b16 %v871, %v867
        %v1236 = vpack.c.b16 %v872, %v868
        %v1237 = vpack.c.b16 %v873, %v869
        %v1238 = vpack.c.b16 %v874, %v870
        %v1239 = vpack.c.b16 %v879, %v875
        %v1240 = vpack.c.b16 %v880, %v876
        %v1241 = vpack.c.b16 %v881, %v877
        %v1242 = vpack.c.b16 %v882, %v878
        %v1243 = vpack.c.b16 %v887, %v883
        %v1244 = vpack.c.b16 %v888, %v884
        %v1245 = vpack.c.b16 %v889, %v885
        %v1246 = vpack.c.b16 %v890, %v886
        %v1247 = vpack.c.b16 %v895, %v891
        %v1248 = vpack.c.b16 %v896, %v892
        %v1249 = vpack.c.b16 %v897, %v893
        %v1250 = vpack.c.b16 %v898, %v894
        %v1251 = vpack.c.b16 %v903, %v899
        %v1252 = vpack.c.b16 %v904, %v900
        %v1253 = vpack.c.b16 %v905, %v901
        %v1254 = vpack.c.b16 %v906, %v902
        %v1255 = vpack.c.b16 %v911, %v907
        %v1256 = vpack.c.b16 %v912, %v908
        %v1257 = vpack.c.b16 %v913, %v909
        %v1258 = vpack.c.b16 %v914, %v910
        %v1259 = vpack.c.b16 %v919, %v915
        %v1260 = vpack.c.b16 %v920, %v916
        %v1261 = vpack.c.b16 %v921, %v917
        %v1262 = vpack.c.b16 %v922, %v918
        %v1263 = vpack.c.b16 %v927, %v923
        %v1264 = vpack.c.b16 %v928, %v924
        %v1265 = vpack.c.b16 %v929, %v925
        %v1266 = vpack.c.b16 %v930, %v926
        %v1267 = vpack.c.b16 %v935, %v931
        %v1268 = vpack.c.b16 %v936, %v932
        %v1269 = vpack.c.b16 %v937, %v933
        %v1270 = vpack.c.b16 %v938, %v934
        %v1271 = vpack.c.b16 %v943, %v939
        %v1272 = vpack.c.b16 %v944, %v940
        %v1273 = vpack.c.b16 %v945, %v941
        %v1274 = vpack.c.b16 %v946, %v942
        %v1275 = vpack.c.b16 %v951, %v947
        %v1276 = vpack.c.b16 %v952, %v948
        %v1277 = vpack.c.b16 %v953, %v949
        %v1278 = vpack.c.b16 %v954, %v950
        %v1279 = vpack.c.b16 %v959, %v955
        %v1280 = vpack.c.b16 %v960, %v956
        %v1281 = vpack.c.b16 %v961, %v957
        %v1282 = vpack.c.b16 %v962, %v958
        %v1283 = vpack.c.b16 %v967, %v963
        %v1284 = vpack.c.b16 %v968, %v964
        %v1285 = vpack.c.b16 %v969, %v965
        %v1286 = vpack.c.b16 %v970, %v966
        %v1287 = vpack.c.b16 %v975, %v971
        %v1288 = vpack.c.b16 %v976, %v972
        %v1289 = vpack.c.b16 %v977, %v973
        %v1290 = vpack.c.b16 %v978, %v974
        %v1291 = vpack.c.b16 %v983, %v979
        %v1292 = vpack.c.b16 %v984, %v980
        %v1293 = vpack.c.b16 %v985, %v981
        %v1294 = vpack.c.b16 %v986, %v982
        %v1295 = vpack.c.b16 %v991, %v987
        %v1296 = vpack.c.b16 %v992, %v988
        %v1297 = vpack.c.b16 %v993, %v989
        %v1298 = vpack.c.b16 %v994, %v990
        %v1299 = vpack.c.b16 %v999, %v995
        %v1300 = vpack.c.b16 %v1000, %v996
        %v1301 = vpack.c.b16 %v1001, %v997
        %v1302 = vpack.c.b16 %v1002, %v998
        %v1303 = vpack.c.b16 %v1007, %v1003
        %v1304 = vpack.c.b16 %v1008, %v1004
        %v1305 = vpack.c.b16 %v1009, %v1005
        %v1306 = vpack.c.b16 %v1010, %v1006
        %v1307 = vpack.c.b16 %v1015, %v1011
        %v1308 = vpack.c.b16 %v1016, %v1012
        %v1309 = vpack.c.b16 %v1017, %v1013
        %v1310 = vpack.c.b16 %v1018, %v1014
        %v1311 = vpack.c.b16 %v1023, %v1019
        %v1312 = vpack.c.b16 %v1024, %v1020
        %v1313 = vpack.c.b16 %v1025, %v1021
        %v1314 = vpack.c.b16 %v1026, %v1022
        %v1315 = vpack.c.b16 %v1031, %v1027
        %v1316 = vpack.c.b16 %v1032, %v1028
        %v1317 = vpack.c.b16 %v1033, %v1029
        %v1318 = vpack.c.b16 %v1034, %v1030
        %v1319 = vpack.c.b16 %v1039, %v1035
        %v1320 = vpack.c.b16 %v1040, %v1036
        %v1321 = vpack.c.b16 %v1041, %v1037
        %v1322 = vpack.c.b16 %v1042, %v1038
        %v1323 = vpack.c.b16 %v1047, %v1043
        %v1324 = vpack.c.b16 %v1048, %v1044
        %v1325 = vpack.c.b16 %v1049, %v1045
        %v1326 = vpack.c.b16 %v1050, %v1046
        %v1327 = vpack.c.b16 %v1055, %v1051
        %v1328 = vpack.c.b16 %v1056, %v1052
        %v1329 = vpack.c.b16 %v1057, %v1053
        %v1330 = vpack.c.b16 %v1058, %v1054
        %v1331 = vpack.c.b16 %v1063, %v1059
        %v1332 = vpack.c.b16 %v1064, %v1060
        %v1333 = vpack.c.b16 %v1065, %v1061
        %v1334 = vpack.c.b16 %v1066, %v1062
        %v1335 = vpack.c.b16 %v1071, %v1067
        %v1336 = vpack.c.b16 %v1072, %v1068
        %v1337 = vpack.c.b16 %v1073, %v1069
        %v1338 = vpack.c.b16 %v1074, %v1070
        %v1339 = vpack.c.b16 %v1079, %v1075
        %v1340 = vpack.c.b16 %v1080, %v1076
        %v1341 = vpack.c.b16 %v1081, %v1077
        %v1342 = vpack.c.b16 %v1082, %v1078
        %v1343 = vpack.c.b16 %v1087, %v1083
        %v1344 = vpack.c.b16 %v1088, %v1084
        %v1345 = vpack.c.b16 %v1089, %v1085
        %v1346 = vpack.c.b16 %v1090, %v1086
        %v1347 = vpack.c.b16 %v1095, %v1091
        %v1348 = vpack.c.b16 %v1096, %v1092
        %v1349 = vpack.c.b16 %v1097, %v1093
        %v1350 = vpack.c.b16 %v1098, %v1094
        %v1351 = vpack.c.b16 %v1103, %v1099
        %v1352 = vpack.c.b16 %v1104, %v1100
        %v1353 = vpack.c.b16 %v1105, %v1101
        %v1354 = vpack.c.b16 %v1106, %v1102
        %v1355 = vpack.c.b16 %v1111, %v1107
        %v1356 = vpack.c.b16 %v1112, %v1108
        %v1357 = vpack.c.b16 %v1113, %v1109
        %v1358 = vpack.c.b16 %v1114, %v1110
        %v1359 = vpack.c.b16 %v1119, %v1115
        %v1360 = vpack.c.b16 %v1120, %v1116
        %v1361 = vpack.c.b16 %v1121, %v1117
        %v1362 = vpack.c.b16 %v1122, %v1118
        %v1363 = vpack.c.b16 %v1127, %v1123
        %v1364 = vpack.c.b16 %v1128, %v1124
        %v1365 = vpack.c.b16 %v1129, %v1125
        %v1366 = vpack.c.b16 %v1130, %v1126
        %v1367 = vpack.c.b16 %v1135, %v1131
        %v1368 = vpack.c.b16 %v1136, %v1132
        %v1369 = vpack.c.b16 %v1137, %v1133
        %v1370 = vpack.c.b16 %v1138, %v1134
        %v1371 = vpack.c.b16 %v1143, %v1139
        %v1372 = vpack.c.b16 %v1144, %v1140
        %v1373 = vpack.c.b16 %v1145, %v1141
        %v1374 = vpack.c.b16 %v1146, %v1142
        %v1375 = vpack.c.b16 %v1151, %v1147
        %v1376 = vpack.c.b16 %v1152, %v1148
        %v1377 = vpack.c.b16 %v1153, %v1149
        %v1378 = vpack.c.b16 %v1154, %v1150
        %v1379 = vpack.c.b16 %v1159, %v1155
        %v1380 = vpack.c.b16 %v1160, %v1156
        %v1381 = vpack.c.b16 %v1161, %v1157
        %v1382 = vpack.c.b16 %v1162, %v1158
        %v1383 = vpack.c.b16 %v1167, %v1163
        %v1384 = vpack.c.b16 %v1168, %v1164
        %v1385 = vpack.c.b16 %v1169, %v1165
        %v1386 = vpack.c.b16 %v1170, %v1166
        %v1387 = vpack.c.b16 %v1175, %v1171
        %v1388 = vpack.c.b16 %v1176, %v1172
        %v1389 = vpack.c.b16 %v1177, %v1173
        %v1390 = vpack.c.b16 %v1178, %v1174
        %v1391 = vpack.c.b16 %v1183, %v1179
        %v1392 = vpack.c.b16 %v1184, %v1180
        %v1393 = vpack.c.b16 %v1185, %v1181
        %v1394 = vpack.c.b16 %v1186, %v1182
        %v1395 = vpack.c.b16 %v1191, %v1187
        %v1396 = vpack.c.b16 %v1192, %v1188
        %v1397 = vpack.c.b16 %v1193, %v1189
        %v1398 = vpack.c.b16 %v1194, %v1190
        %v1399 = vpack.c.b16 %v1199, %v1195
        %v1400 = vpack.c.b16 %v1200, %v1196
        %v1401 = vpack.c.b16 %v1201, %v1197
        %v1402 = vpack.c.b16 %v1202, %v1198
        %v1403 = vpack.c.b16 %v1207, %v1203
        %v1404 = vpack.c.b16 %v1208, %v1204
        %v1405 = vpack.c.b16 %v1209, %v1205
        %v1406 = vpack.c.b16 %v1210, %v1206
        %v1407 = vpack.c.b16 %v1215, %v1211
        %v1408 = vpack.c.b16 %v1216, %v1212
        %v1409 = vpack.c.b16 %v1217, %v1213
        %v1410 = vpack.c.b16 %v1218, %v1214
        %1603 = vmatprep.subr.bf16.mxu0 %v1220
        %1604 = vmatpush1.bf16.msra.mxu0 %v1219
        %1605 = vmatprep.subr.bf16.mxu0 %v1224
        %1606 = vmatpush1.bf16.msra.mxu0 %v1223
        %1607 = vmatprep.subr.bf16.mxu0 %v1228
        %1608 = vmatpush1.bf16.msra.mxu0 %v1227
        %1609 = vmatprep.subr.bf16.mxu0 %v1232
        %1610 = vmatpush1.bf16.msra.mxu0 %v1231
        %1611 = vmatprep.subr.bf16.mxu0 %v1236
        %1612 = vmatpush1.bf16.msra.mxu0 %v1235
        %1613 = vmatprep.subr.bf16.mxu0 %v1240
        %1614 = vmatpush1.bf16.msra.mxu0 %v1239
        %1615 = vmatprep.subr.bf16.mxu0 %v1244
        %1616 = vmatpush1.bf16.msra.mxu0 %v1243
        %1617 = vmatprep.subr.bf16.mxu0 %v1248
        %1618 = vmatpush1.bf16.msra.mxu0 %v1247
        %1619 = vmatprep.subr.bf16.mxu0 %v1252
        %1620 = vmatpush1.bf16.msra.mxu0 %v1251
        %1621 = vmatprep.subr.bf16.mxu0 %v1256
        %1622 = vmatpush1.bf16.msra.mxu0 %v1255
        %1623 = vmatprep.subr.bf16.mxu0 %v1260
        %1624 = vmatpush1.bf16.msra.mxu0 %v1259
        %1625 = vmatprep.subr.bf16.mxu0 %v1264
        %1626 = vmatpush1.bf16.msra.mxu0 %v1263
        %1627 = vmatprep.subr.bf16.mxu0 %v1268
        %1628 = vmatpush1.bf16.msra.mxu0 %v1267
        %1629 = vmatprep.subr.bf16.mxu0 %v1272
        %1630 = vmatpush1.bf16.msra.mxu0 %v1271
        %1631 = vmatprep.subr.bf16.mxu0 %v1276
        %1632 = vmatpush1.bf16.msra.mxu0 %v1275
        %1633 = vmatprep.subr.bf16.mxu0 %v1280
        %1634 = vmatpush1.bf16.msra.mxu0 %v1279
        %1635 = vmatprep.mubr.bf16.mxu0 %v632
        %1636 = vmatmul.mubr.bf16.gmra.mrb[0].mxu0 %v631
        %v1637 = vpop.f32.mrb[0].mxu0
        %v1638 = vadd.f32 0.0, %v1637
        %v1639 = vpop.f32.mrb[0].mxu0
        %v1640 = vadd.f32 0.0, %v1639
        %v1641 = vpop.f32.mrb[0].mxu0
        %v1642 = vpop.f32.mrb[0].mxu0
        %1643 = vdwg.mxu0
        %1644 = vmatprep.subr.bf16.mxu0 %v1284
        %1645 = vmatpush1.bf16.msra.mxu0 %v1283
        %1646 = vmatprep.subr.bf16.mxu0 %v1288
        %1647 = vmatpush1.bf16.msra.mxu0 %v1287
        %1648 = vmatprep.subr.bf16.mxu0 %v1292
        %1649 = vmatpush1.bf16.msra.mxu0 %v1291
        %1650 = vmatprep.subr.bf16.mxu0 %v1296
        %1651 = vmatpush1.bf16.msra.mxu0 %v1295
        %1652 = vmatprep.subr.bf16.mxu0 %v1300
        %1653 = vmatpush1.bf16.msra.mxu0 %v1299
        %1654 = vmatprep.subr.bf16.mxu0 %v1304
        %1655 = vmatpush1.bf16.msra.mxu0 %v1303
        %1656 = vmatprep.subr.bf16.mxu0 %v1308
        %1657 = vmatpush1.bf16.msra.mxu0 %v1307
        %1658 = vmatprep.subr.bf16.mxu0 %v1312
        %1659 = vmatpush1.bf16.msra.mxu0 %v1311
        %1660 = vmatprep.subr.bf16.mxu0 %v1316
        %1661 = vmatpush1.bf16.msra.mxu0 %v1315
        %1662 = vmatprep.subr.bf16.mxu0 %v1320
        %1663 = vmatpush1.bf16.msra.mxu0 %v1319
        %1664 = vmatprep.subr.bf16.mxu0 %v1324
        %1665 = vmatpush1.bf16.msra.mxu0 %v1323
        %1666 = vmatprep.subr.bf16.mxu0 %v1328
        %1667 = vmatpush1.bf16.msra.mxu0 %v1327
        %1668 = vmatprep.subr.bf16.mxu0 %v1332
        %1669 = vmatpush1.bf16.msra.mxu0 %v1331
        %1670 = vmatprep.subr.bf16.mxu0 %v1336
        %1671 = vmatpush1.bf16.msra.mxu0 %v1335
        %1672 = vmatprep.subr.bf16.mxu0 %v1340
        %1673 = vmatpush1.bf16.msra.mxu0 %v1339
        %1674 = vmatprep.subr.bf16.mxu0 %v1344
        %1675 = vmatpush1.bf16.msra.mxu0 %v1343
        %1676 = vmatprep.mubr.bf16.mxu0 %v634
        %1677 = vmatmul.mubr.bf16.gmra.mrb[0].mxu0 %v633
        %v1678 = vpop.f32.mrb[0].mxu0
        %v1679 = vadd.f32 %v1638, %v1678
        %v1680 = vpop.f32.mrb[0].mxu0
        %v1681 = vadd.f32 %v1640, %v1680
        %v1682 = vpop.f32.mrb[0].mxu0
        %v1683 = vpop.f32.mrb[0].mxu0
        %1684 = vdwg.mxu0
        %1685 = vmatprep.subr.bf16.mxu0 %v1348
        %1686 = vmatpush1.bf16.msra.mxu0 %v1347
        %1687 = vmatprep.subr.bf16.mxu0 %v1352
        %1688 = vmatpush1.bf16.msra.mxu0 %v1351
        %1689 = vmatprep.subr.bf16.mxu0 %v1356
        %1690 = vmatpush1.bf16.msra.mxu0 %v1355
        %1691 = vmatprep.subr.bf16.mxu0 %v1360
        %1692 = vmatpush1.bf16.msra.mxu0 %v1359
        %1693 = vmatprep.subr.bf16.mxu0 %v1364
        %1694 = vmatpush1.bf16.msra.mxu0 %v1363
        %1695 = vmatprep.subr.bf16.mxu0 %v1368
        %1696 = vmatpush1.bf16.msra.mxu0 %v1367
        %1697 = vmatprep.subr.bf16.mxu0 %v1372
        %1698 = vmatpush1.bf16.msra.mxu0 %v1371
        %1699 = vmatprep.subr.bf16.mxu0 %v1376
        %1700 = vmatpush1.bf16.msra.mxu0 %v1375
        %1701 = vmatprep.subr.bf16.mxu0 %v1380
        %1702 = vmatpush1.bf16.msra.mxu0 %v1379
        %1703 = vmatprep.subr.bf16.mxu0 %v1384
        %1704 = vmatpush1.bf16.msra.mxu0 %v1383
        %1705 = vmatprep.subr.bf16.mxu0 %v1388
        %1706 = vmatpush1.bf16.msra.mxu0 %v1387
        %1707 = vmatprep.subr.bf16.mxu0 %v1392
        %1708 = vmatpush1.bf16.msra.mxu0 %v1391
        %1709 = vmatprep.subr.bf16.mxu0 %v1396
        %1710 = vmatpush1.bf16.msra.mxu0 %v1395
        %1711 = vmatprep.subr.bf16.mxu0 %v1400
        %1712 = vmatpush1.bf16.msra.mxu0 %v1399
        %1713 = vmatprep.subr.bf16.mxu0 %v1404
        %1714 = vmatpush1.bf16.msra.mxu0 %v1403
        %1715 = vmatprep.subr.bf16.mxu0 %v1408
        %1716 = vmatpush1.bf16.msra.mxu0 %v1407
        %1717 = vmatprep.mubr.bf16.mxu0 %v636
        %1718 = vmatmul.mubr.bf16.gmra.mrb[0].mxu0 %v635
        %v1719 = vpop.f32.mrb[0].mxu0
        %v1720 = vadd.f32 %v1679, %v1719
        %v1721 = vpop.f32.mrb[0].mxu0
        %v1722 = vadd.f32 %v1681, %v1721
        %v1723 = vpop.f32.mrb[0].mxu0
        %v1724 = vpop.f32.mrb[0].mxu0
        %1725 = vdwg.mxu0
        %1726 = vmatprep.subr.bf16.mxu0 %v1222
        %1727 = vmatpush1.bf16.msra.mxu0 %v1221
        %1728 = vmatprep.subr.bf16.mxu0 %v1226
        %1729 = vmatpush1.bf16.msra.mxu0 %v1225
        %1730 = vmatprep.subr.bf16.mxu0 %v1230
        %1731 = vmatpush1.bf16.msra.mxu0 %v1229
        %1732 = vmatprep.subr.bf16.mxu0 %v1234
        %1733 = vmatpush1.bf16.msra.mxu0 %v1233
        %1734 = vmatprep.subr.bf16.mxu0 %v1238
        %1735 = vmatpush1.bf16.msra.mxu0 %v1237
        %1736 = vmatprep.subr.bf16.mxu0 %v1242
        %1737 = vmatpush1.bf16.msra.mxu0 %v1241
        %1738 = vmatprep.subr.bf16.mxu0 %v1246
        %1739 = vmatpush1.bf16.msra.mxu0 %v1245
        %1740 = vmatprep.subr.bf16.mxu0 %v1250
        %1741 = vmatpush1.bf16.msra.mxu0 %v1249
        %1742 = vmatprep.subr.bf16.mxu0 %v1254
        %1743 = vmatpush1.bf16.msra.mxu0 %v1253
        %1744 = vmatprep.subr.bf16.mxu0 %v1258
        %1745 = vmatpush1.bf16.msra.mxu0 %v1257
        %1746 = vmatprep.subr.bf16.mxu0 %v1262
        %1747 = vmatpush1.bf16.msra.mxu0 %v1261
        %1748 = vmatprep.subr.bf16.mxu0 %v1266
        %1749 = vmatpush1.bf16.msra.mxu0 %v1265
        %1750 = vmatprep.subr.bf16.mxu0 %v1270
        %1751 = vmatpush1.bf16.msra.mxu0 %v1269
        %1752 = vmatprep.subr.bf16.mxu0 %v1274
        %1753 = vmatpush1.bf16.msra.mxu0 %v1273
        %1754 = vmatprep.subr.bf16.mxu0 %v1278
        %1755 = vmatpush1.bf16.msra.mxu0 %v1277
        %1756 = vmatprep.subr.bf16.mxu0 %v1282
        %1757 = vmatpush1.bf16.msra.mxu0 %v1281
        %1758 = vmatprep.mubr.bf16.mxu0 %v632
        %1759 = vmatmul.mubr.bf16.gmra.mrb[0].mxu0 %v631
        %v1760 = vpop.f32.mrb[0].mxu0
        %v1761 = vadd.f32 0.0, %v1760
        %v1762 = vpop.f32.mrb[0].mxu0
        %v1763 = vadd.f32 0.0, %v1762
        %v1764 = vpop.f32.mrb[0].mxu0
        %v1765 = vpop.f32.mrb[0].mxu0
        %1766 = vdwg.mxu0
        %1767 = vmatprep.subr.bf16.mxu0 %v1286
        %1768 = vmatpush1.bf16.msra.mxu0 %v1285
        %1769 = vmatprep.subr.bf16.mxu0 %v1290
        %1770 = vmatpush1.bf16.msra.mxu0 %v1289
        %1771 = vmatprep.subr.bf16.mxu0 %v1294
        %1772 = vmatpush1.bf16.msra.mxu0 %v1293
        %1773 = vmatprep.subr.bf16.mxu0 %v1298
        %1774 = vmatpush1.bf16.msra.mxu0 %v1297
        %1775 = vmatprep.subr.bf16.mxu0 %v1302
        %1776 = vmatpush1.bf16.msra.mxu0 %v1301
        %1777 = vmatprep.subr.bf16.mxu0 %v1306
        %1778 = vmatpush1.bf16.msra.mxu0 %v1305
        %1779 = vmatprep.subr.bf16.mxu0 %v1310
        %1780 = vmatpush1.bf16.msra.mxu0 %v1309
        %1781 = vmatprep.subr.bf16.mxu0 %v1314
        %1782 = vmatpush1.bf16.msra.mxu0 %v1313
        %1783 = vmatprep.subr.bf16.mxu0 %v1318
        %1784 = vmatpush1.bf16.msra.mxu0 %v1317
        %1785 = vmatprep.subr.bf16.mxu0 %v1322
        %1786 = vmatpush1.bf16.msra.mxu0 %v1321
        %1787 = vmatprep.subr.bf16.mxu0 %v1326
        %1788 = vmatpush1.bf16.msra.mxu0 %v1325
        %1789 = vmatprep.subr.bf16.mxu0 %v1330
        %1790 = vmatpush1.bf16.msra.mxu0 %v1329
        %1791 = vmatprep.subr.bf16.mxu0 %v1334
        %1792 = vmatpush1.bf16.msra.mxu0 %v1333
        %1793 = vmatprep.subr.bf16.mxu0 %v1338
        %1794 = vmatpush1.bf16.msra.mxu0 %v1337
        %1795 = vmatprep.subr.bf16.mxu0 %v1342
        %1796 = vmatpush1.bf16.msra.mxu0 %v1341
        %1797 = vmatprep.subr.bf16.mxu0 %v1346
        %1798 = vmatpush1.bf16.msra.mxu0 %v1345
        %1799 = vmatprep.mubr.bf16.mxu0 %v634
        %1800 = vmatmul.mubr.bf16.gmra.mrb[0].mxu0 %v633
        %v1801 = vpop.f32.mrb[0].mxu0
        %v1802 = vadd.f32 %v1761, %v1801
        %v1803 = vpop.f32.mrb[0].mxu0
        %v1804 = vadd.f32 %v1763, %v1803
        %v1805 = vpop.f32.mrb[0].mxu0
        %v1806 = vpop.f32.mrb[0].mxu0
        %1807 = vdwg.mxu0
        %1808 = vmatprep.subr.bf16.mxu0 %v1350
        %1809 = vmatpush1.bf16.msra.mxu0 %v1349
        %1810 = vmatprep.subr.bf16.mxu0 %v1354
        %1811 = vmatpush1.bf16.msra.mxu0 %v1353
        %1812 = vmatprep.subr.bf16.mxu0 %v1358
        %1813 = vmatpush1.bf16.msra.mxu0 %v1357
        %1814 = vmatprep.subr.bf16.mxu0 %v1362
        %1815 = vmatpush1.bf16.msra.mxu0 %v1361
        %1816 = vmatprep.subr.bf16.mxu0 %v1366
        %1817 = vmatpush1.bf16.msra.mxu0 %v1365
        %1818 = vmatprep.subr.bf16.mxu0 %v1370
        %1819 = vmatpush1.bf16.msra.mxu0 %v1369
        %1820 = vmatprep.subr.bf16.mxu0 %v1374
        %1821 = vmatpush1.bf16.msra.mxu0 %v1373
        %1822 = vmatprep.subr.bf16.mxu0 %v1378
        %1823 = vmatpush1.bf16.msra.mxu0 %v1377
        %1824 = vmatprep.subr.bf16.mxu0 %v1382
        %1825 = vmatpush1.bf16.msra.mxu0 %v1381
        %1826 = vmatprep.subr.bf16.mxu0 %v1386
        %1827 = vmatpush1.bf16.msra.mxu0 %v1385
        %1828 = vmatprep.subr.bf16.mxu0 %v1390
        %1829 = vmatpush1.bf16.msra.mxu0 %v1389
        %1830 = vmatprep.subr.bf16.mxu0 %v1394
        %1831 = vmatpush1.bf16.msra.mxu0 %v1393
        %1832 = vmatprep.subr.bf16.mxu0 %v1398
        %1833 = vmatpush1.bf16.msra.mxu0 %v1397
        %1834 = vmatprep.subr.bf16.mxu0 %v1402
        %1835 = vmatpush1.bf16.msra.mxu0 %v1401
        %1836 = vmatprep.subr.bf16.mxu0 %v1406
        %1837 = vmatpush1.bf16.msra.mxu0 %v1405
        %1838 = vmatprep.subr.bf16.mxu0 %v1410
        %1839 = vmatpush1.bf16.msra.mxu0 %v1409
        %1840 = vmatprep.mubr.bf16.mxu0 %v636
        %1841 = vmatmul.mubr.bf16.gmra.mrb[0].mxu0 %v635
        %v1842 = vpop.f32.mrb[0].mxu0
        %v1843 = vadd.f32 %v1802, %v1842
        %v1844 = vpop.f32.mrb[0].mxu0
        %v1845 = vadd.f32 %v1804, %v1844
        %v1846 = vpop.f32.mrb[0].mxu0
        %v1847 = vpop.f32.mrb[0].mxu0
        %1848 = vdwg.mxu0
        %v1849 = vadd.f32 %v423, %v1720
        %v1850 = vadd.f32 %v424, %v1722
        %v1851 = vadd.f32 %v425, %v1843
        %v1852 = vadd.f32 %v426, %v1845
        %1853 = vst [vmem:[#allocation2] sm:$0xff] %v1849
        %1854 = vst [vmem:[#allocation2 + $0x8] sm:$0xff] %v1850
        %1855 = vst [vmem:[#allocation2 + $0x10] sm:$0xff] %v1851
        %1856 = vst [vmem:[#allocation2 + $0x18] sm:$0xff] %v1852
        %p1857 = scmp.eq.s32.totalorder %s29, 3
        // Predicated region
        $region77: #{cifar_net_forward.1} parent=47 // pred_check
          %p1858 = pneg %p1857
        $region78: #{cifar_net_forward.1} parent=47 // pred_check_branch
          %1860 = sbr.rel (%p1858) target = $region80
        $region79: #{cifar_net_forward.1} parent=47 // pred_region
          %v1861 = vld [vmem:[#allocation2] sm:$0xff]
          %v1862 = vld [vmem:[#allocation2 + $0x8] sm:$0xff]
          %v1863 = vld [vmem:[#allocation2 + $0x10] sm:$0xff]
          %v1864 = vld [vmem:[#allocation2 + $0x18] sm:$0xff]
          %v1865 = vld [vmem:[#allocation5] sm:$0xf]
          %v1867 = vlaneseq
          %v1868 = vshrl.u32 %v1867, 7
          %v1869 = vsub.s32 0, %v1868
          %v1870 = vrot.slane %v1865, %v1869
          %v1871 = vlaneseq
          %v1872 = vshrl.u32 %v1871, 7
          %v1873 = vsub.s32 1, %v1872
          %v1874 = vrot.slane %v1865, %v1873
          %v1875 = vlaneseq
          %v1876 = vshrl.u32 %v1875, 7
          %v1877 = vsub.s32 2, %v1876
          %v1878 = vrot.slane %v1865, %v1877
          %v1879 = vlaneseq
          %v1880 = vshrl.u32 %v1879, 7
          %v1881 = vsub.s32 3, %v1880
          %v1882 = vrot.slane %v1865, %v1881
          %v1887 = vadd.f32 %v1861, %v1870
          %v1888 = vadd.f32 %v1862, %v1874
          %v1889 = vadd.f32 %v1863, %v1878
          %v1890 = vadd.f32 %v1864, %v1882
          %v1891 = vmax.f32 %v1887, 0.0
          %v1892 = vmax.f32 %v1888, 0.0
          %v1893 = vmax.f32 %v1889, 0.0
          %v1894 = vmax.f32 %v1890, 0.0
          %v1895 = vpack.c.bf16 %v1891, %v1891
          %v1896 = vpack.c.bf16 %v1892, %v1892
          %v1897 = vpack.c.bf16 %v1893, %v1893
          %v1898 = vpack.c.bf16 %v1894, %v1894
          %v1899 = vld [vmem:[#allocation7] sm:$0xf]
          %v1900 = vld [vmem:[#allocation7 + $0x4] sm:$0xf]
          %v1901 = vld [vmem:[#allocation7 + $0x8] sm:$0xf]
          %v1902 = vld [vmem:[#allocation7 + $0xc] sm:$0xf]
          %v1903 = vld [vmem:[#allocation7 + $0x10] sm:$0xf]
          %v1904 = vld [vmem:[#allocation7 + $0x14] sm:$0xf]
          %v1905 = vld [vmem:[#allocation7 + $0x18] sm:$0xf]
          %v1906 = vld [vmem:[#allocation7 + $0x1c] sm:$0xf]
          %v1907 = vld [vmem:[#allocation7 + $0x20] sm:$0xf]
          %v1908 = vld [vmem:[#allocation7 + $0x24] sm:$0xf]
          %v1909 = vld [vmem:[#allocation7 + $0x28] sm:$0xf]
          %v1910 = vld [vmem:[#allocation7 + $0x2c] sm:$0xf]
          %v1911 = vld [vmem:[#allocation7 + $0x30] sm:$0xf]
          %v1912 = vld [vmem:[#allocation7 + $0x34] sm:$0xf]
          %v1913 = vld [vmem:[#allocation7 + $0x38] sm:$0xf]
          %v1914 = vld [vmem:[#allocation7 + $0x3c] sm:$0xf]
          %v1915 = vld [vmem:[#allocation7 + $0x40] sm:$0xf]
          %v1916 = vld [vmem:[#allocation7 + $0x44] sm:$0xf]
          %v1917 = vld [vmem:[#allocation7 + $0x48] sm:$0xf]
          %v1918 = vld [vmem:[#allocation7 + $0x4c] sm:$0xf]
          %v1919 = vld [vmem:[#allocation7 + $0x50] sm:$0xf]
          %v1920 = vld [vmem:[#allocation7 + $0x54] sm:$0xf]
          %v1921 = vld [vmem:[#allocation7 + $0x58] sm:$0xf]
          %v1922 = vld [vmem:[#allocation7 + $0x5c] sm:$0xf]
          %v1923 = vld [vmem:[#allocation7 + $0x60] sm:$0xf]
          %v1924 = vld [vmem:[#allocation7 + $0x64] sm:$0xf]
          %v1925 = vld [vmem:[#allocation7 + $0x68] sm:$0xf]
          %v1926 = vld [vmem:[#allocation7 + $0x6c] sm:$0xf]
          %v1927 = vld [vmem:[#allocation7 + $0x70] sm:$0xf]
          %v1928 = vld [vmem:[#allocation7 + $0x74] sm:$0xf]
          %v1929 = vld [vmem:[#allocation7 + $0x78] sm:$0xf]
          %v1930 = vld [vmem:[#allocation7 + $0x7c] sm:$0xf]
          %v1931 = vld [vmem:[#allocation7 + $0x80] sm:$0xf]
          %v1932 = vld [vmem:[#allocation7 + $0x84] sm:$0xf]
          %v1933 = vld [vmem:[#allocation7 + $0x88] sm:$0xf]
          %v1934 = vld [vmem:[#allocation7 + $0x8c] sm:$0xf]
          %v1935 = vld [vmem:[#allocation7 + $0x90] sm:$0xf]
          %v1936 = vld [vmem:[#allocation7 + $0x94] sm:$0xf]
          %v1937 = vld [vmem:[#allocation7 + $0x98] sm:$0xf]
          %v1938 = vld [vmem:[#allocation7 + $0x9c] sm:$0xf]
          %v1939 = vld [vmem:[#allocation7 + $0xa0] sm:$0xf]
          %v1940 = vld [vmem:[#allocation7 + $0xa4] sm:$0xf]
          %v1941 = vld [vmem:[#allocation7 + $0xa8] sm:$0xf]
          %v1942 = vld [vmem:[#allocation7 + $0xac] sm:$0xf]
          %v1943 = vld [vmem:[#allocation7 + $0xb0] sm:$0xf]
          %v1944 = vld [vmem:[#allocation7 + $0xb4] sm:$0xf]
          %v1945 = vld [vmem:[#allocation7 + $0xb8] sm:$0xf]
          %v1946 = vld [vmem:[#allocation7 + $0xbc] sm:$0xf]
          %v1947 = vld [vmem:[#allocation7 + $0xc0] sm:$0xf]
          %v1948 = vld [vmem:[#allocation7 + $0xc4] sm:$0xf]
          %v1949 = vld [vmem:[#allocation7 + $0xc8] sm:$0xf]
          %v1950 = vld [vmem:[#allocation7 + $0xcc] sm:$0xf]
          %v1951 = vld [vmem:[#allocation7 + $0xd0] sm:$0xf]
          %v1952 = vld [vmem:[#allocation7 + $0xd4] sm:$0xf]
          %v1953 = vld [vmem:[#allocation7 + $0xd8] sm:$0xf]
          %v1954 = vld [vmem:[#allocation7 + $0xdc] sm:$0xf]
          %v1955 = vld [vmem:[#allocation7 + $0xe0] sm:$0xf]
          %v1956 = vld [vmem:[#allocation7 + $0xe4] sm:$0xf]
          %v1957 = vld [vmem:[#allocation7 + $0xe8] sm:$0xf]
          %v1958 = vld [vmem:[#allocation7 + $0xec] sm:$0xf]
          %v1959 = vld [vmem:[#allocation7 + $0xf0] sm:$0xf]
          %v1960 = vld [vmem:[#allocation7 + $0xf4] sm:$0xf]
          %v1961 = vld [vmem:[#allocation7 + $0xf8] sm:$0xf]
          %v1962 = vld [vmem:[#allocation7 + $0xfc] sm:$0xf]
          %v1963 = vld [vmem:[#allocation8] sm:$0x1]
          %v1965 = vlaneseq
          %v1966 = vshrl.u32 %v1965, 7
          %v1967 = vsub.s32 0, %v1966
          %v1968 = vrot.slane %v1963, %v1967
          %v2034 = vunpack.c.l.b16 %v1899
          %v2035 = vunpack.c.l.b16 %v1900
          %v2036 = vunpack.c.l.b16 %v1901
          %v2037 = vunpack.c.l.b16 %v1902
          %v2038 = vunpack.c.l.b16 %v1903
          %v2039 = vunpack.c.l.b16 %v1904
          %v2040 = vunpack.c.l.b16 %v1905
          %v2041 = vunpack.c.l.b16 %v1906
          %v2042 = vunpack.c.l.b16 %v1907
          %v2043 = vunpack.c.l.b16 %v1908
          %v2044 = vunpack.c.l.b16 %v1909
          %v2045 = vunpack.c.l.b16 %v1910
          %v2046 = vunpack.c.l.b16 %v1911
          %v2047 = vunpack.c.l.b16 %v1912
          %v2048 = vunpack.c.l.b16 %v1913
          %v2049 = vunpack.c.l.b16 %v1914
          %v2050 = vunpack.c.l.b16 %v1915
          %v2051 = vunpack.c.l.b16 %v1916
          %v2052 = vunpack.c.l.b16 %v1917
          %v2053 = vunpack.c.l.b16 %v1918
          %v2054 = vunpack.c.l.b16 %v1919
          %v2055 = vunpack.c.l.b16 %v1920
          %v2056 = vunpack.c.l.b16 %v1921
          %v2057 = vunpack.c.l.b16 %v1922
          %v2058 = vunpack.c.l.b16 %v1923
          %v2059 = vunpack.c.l.b16 %v1924
          %v2060 = vunpack.c.l.b16 %v1925
          %v2061 = vunpack.c.l.b16 %v1926
          %v2062 = vunpack.c.l.b16 %v1927
          %v2063 = vunpack.c.l.b16 %v1928
          %v2064 = vunpack.c.l.b16 %v1929
          %v2065 = vunpack.c.l.b16 %v1930
          %v2066 = vunpack.c.l.b16 %v1931
          %v2067 = vunpack.c.l.b16 %v1932
          %v2068 = vunpack.c.l.b16 %v1933
          %v2069 = vunpack.c.l.b16 %v1934
          %v2070 = vunpack.c.l.b16 %v1935
          %v2071 = vunpack.c.l.b16 %v1936
          %v2072 = vunpack.c.l.b16 %v1937
          %v2073 = vunpack.c.l.b16 %v1938
          %v2074 = vunpack.c.l.b16 %v1939
          %v2075 = vunpack.c.l.b16 %v1940
          %v2076 = vunpack.c.l.b16 %v1941
          %v2077 = vunpack.c.l.b16 %v1942
          %v2078 = vunpack.c.l.b16 %v1943
          %v2079 = vunpack.c.l.b16 %v1944
          %v2080 = vunpack.c.l.b16 %v1945
          %v2081 = vunpack.c.l.b16 %v1946
          %v2082 = vunpack.c.l.b16 %v1947
          %v2083 = vunpack.c.l.b16 %v1948
          %v2084 = vunpack.c.l.b16 %v1949
          %v2085 = vunpack.c.l.b16 %v1950
          %v2086 = vunpack.c.l.b16 %v1951
          %v2087 = vunpack.c.l.b16 %v1952
          %v2088 = vunpack.c.l.b16 %v1953
          %v2089 = vunpack.c.l.b16 %v1954
          %v2090 = vunpack.c.l.b16 %v1955
          %v2091 = vunpack.c.l.b16 %v1956
          %v2092 = vunpack.c.l.b16 %v1957
          %v2093 = vunpack.c.l.b16 %v1958
          %v2094 = vunpack.c.l.b16 %v1959
          %v2095 = vunpack.c.l.b16 %v1960
          %v2096 = vunpack.c.l.b16 %v1961
          %v2097 = vunpack.c.l.b16 %v1962
          %v2098 = vpack.c.b16 %v2035, %v2034
          %v2099 = vpack.c.b16 %v2037, %v2036
          %v2100 = vpack.c.b16 %v2039, %v2038
          %v2101 = vpack.c.b16 %v2041, %v2040
          %v2102 = vpack.c.b16 %v2043, %v2042
          %v2103 = vpack.c.b16 %v2045, %v2044
          %v2104 = vpack.c.b16 %v2047, %v2046
          %v2105 = vpack.c.b16 %v2049, %v2048
          %v2106 = vpack.c.b16 %v2051, %v2050
          %v2107 = vpack.c.b16 %v2053, %v2052
          %v2108 = vpack.c.b16 %v2055, %v2054
          %v2109 = vpack.c.b16 %v2057, %v2056
          %v2110 = vpack.c.b16 %v2059, %v2058
          %v2111 = vpack.c.b16 %v2061, %v2060
          %v2112 = vpack.c.b16 %v2063, %v2062
          %v2113 = vpack.c.b16 %v2065, %v2064
          %v2114 = vpack.c.b16 %v2067, %v2066
          %v2115 = vpack.c.b16 %v2069, %v2068
          %v2116 = vpack.c.b16 %v2071, %v2070
          %v2117 = vpack.c.b16 %v2073, %v2072
          %v2118 = vpack.c.b16 %v2075, %v2074
          %v2119 = vpack.c.b16 %v2077, %v2076
          %v2120 = vpack.c.b16 %v2079, %v2078
          %v2121 = vpack.c.b16 %v2081, %v2080
          %v2122 = vpack.c.b16 %v2083, %v2082
          %v2123 = vpack.c.b16 %v2085, %v2084
          %v2124 = vpack.c.b16 %v2087, %v2086
          %v2125 = vpack.c.b16 %v2089, %v2088
          %v2126 = vpack.c.b16 %v2091, %v2090
          %v2127 = vpack.c.b16 %v2093, %v2092
          %v2128 = vpack.c.b16 %v2095, %v2094
          %v2129 = vpack.c.b16 %v2097, %v2096
          %2162 = vmatprep.subr.bf16.mxu0 0
          %2163 = vmatpush1.bf16.msra.mxu0 %v2098
          %2164 = vmatprep.subr.bf16.mxu0 0
          %2165 = vmatpush1.bf16.msra.mxu0 %v2099
          %2166 = vmatprep.subr.bf16.mxu0 0
          %2167 = vmatpush1.bf16.msra.mxu0 %v2100
          %2168 = vmatprep.subr.bf16.mxu0 0
          %2169 = vmatpush1.bf16.msra.mxu0 %v2101
          %2170 = vmatprep.subr.bf16.mxu0 0
          %2171 = vmatpush1.bf16.msra.mxu0 %v2102
          %2172 = vmatprep.subr.bf16.mxu0 0
          %2173 = vmatpush1.bf16.msra.mxu0 %v2103
          %2174 = vmatprep.subr.bf16.mxu0 0
          %2175 = vmatpush1.bf16.msra.mxu0 %v2104
          %2176 = vmatprep.subr.bf16.mxu0 0
          %2177 = vmatpush1.bf16.msra.mxu0 %v2105
          %2178 = vmatprep.subr.bf16.mxu0 0
          %2179 = vmatpush1.bf16.msra.mxu0 %v2106
          %2180 = vmatprep.subr.bf16.mxu0 0
          %2181 = vmatpush1.bf16.msra.mxu0 %v2107
          %2182 = vmatprep.subr.bf16.mxu0 0
          %2183 = vmatpush1.bf16.msra.mxu0 %v2108
          %2184 = vmatprep.subr.bf16.mxu0 0
          %2185 = vmatpush1.bf16.msra.mxu0 %v2109
          %2186 = vmatprep.subr.bf16.mxu0 0
          %2187 = vmatpush1.bf16.msra.mxu0 %v2110
          %2188 = vmatprep.subr.bf16.mxu0 0
          %2189 = vmatpush1.bf16.msra.mxu0 %v2111
          %2190 = vmatprep.subr.bf16.mxu0 0
          %2191 = vmatpush1.bf16.msra.mxu0 %v2112
          %2192 = vmatprep.subr.bf16.mxu0 0
          %2193 = vmatpush1.bf16.msra.mxu0 %v2113
          %2194 = vmatprep.mubr.bf16.mxu0 %v1896
          %2195 = vmatmul.mubr.bf16.gmra.mrb[0].mxu0 %v1895
          %v2196 = vpop.f32.mrb[0].mxu0
          %v2197 = vadd.f32 %v1968, %v2196
          %v2198 = vpop.f32.mrb[0].mxu0
          %v2199 = vpop.f32.mrb[0].mxu0
          %v2200 = vpop.f32.mrb[0].mxu0
          %2201 = vdwg.mxu0
          %2202 = vmatprep.subr.bf16.mxu0 0
          %2203 = vmatpush1.bf16.msra.mxu0 %v2114
          %2204 = vmatprep.subr.bf16.mxu0 0
          %2205 = vmatpush1.bf16.msra.mxu0 %v2115
          %2206 = vmatprep.subr.bf16.mxu0 0
          %2207 = vmatpush1.bf16.msra.mxu0 %v2116
          %2208 = vmatprep.subr.bf16.mxu0 0
          %2209 = vmatpush1.bf16.msra.mxu0 %v2117
          %2210 = vmatprep.subr.bf16.mxu0 0
          %2211 = vmatpush1.bf16.msra.mxu0 %v2118
          %2212 = vmatprep.subr.bf16.mxu0 0
          %2213 = vmatpush1.bf16.msra.mxu0 %v2119
          %2214 = vmatprep.subr.bf16.mxu0 0
          %2215 = vmatpush1.bf16.msra.mxu0 %v2120
          %2216 = vmatprep.subr.bf16.mxu0 0
          %2217 = vmatpush1.bf16.msra.mxu0 %v2121
          %2218 = vmatprep.subr.bf16.mxu0 0
          %2219 = vmatpush1.bf16.msra.mxu0 %v2122
          %2220 = vmatprep.subr.bf16.mxu0 0
          %2221 = vmatpush1.bf16.msra.mxu0 %v2123
          %2222 = vmatprep.subr.bf16.mxu0 0
          %2223 = vmatpush1.bf16.msra.mxu0 %v2124
          %2224 = vmatprep.subr.bf16.mxu0 0
          %2225 = vmatpush1.bf16.msra.mxu0 %v2125
          %2226 = vmatprep.subr.bf16.mxu0 0
          %2227 = vmatpush1.bf16.msra.mxu0 %v2126
          %2228 = vmatprep.subr.bf16.mxu0 0
          %2229 = vmatpush1.bf16.msra.mxu0 %v2127
          %2230 = vmatprep.subr.bf16.mxu0 0
          %2231 = vmatpush1.bf16.msra.mxu0 %v2128
          %2232 = vmatprep.subr.bf16.mxu0 0
          %2233 = vmatpush1.bf16.msra.mxu0 %v2129
          %2234 = vmatprep.mubr.bf16.mxu0 %v1898
          %2235 = vmatmul.mubr.bf16.gmra.mrb[0].mxu0 %v1897
          %v2236 = vpop.f32.mrb[0].mxu0
          %v2237 = vadd.f32 %v2197, %v2236
          %v2238 = vpop.f32.mrb[0].mxu0
          %v2239 = vpop.f32.mrb[0].mxu0
          %v2240 = vpop.f32.mrb[0].mxu0
          %2241 = vdwg.mxu0
          %v2242 = vmax.f32 %v2237, 0.0
          %v2243 = vpack.c.bf16 %v2242, %v2242
          %v2244 = vld [vmem:[#allocation10] sm:$0xf]
          %v2245 = vld [vmem:[#allocation10 + $0x4] sm:$0xf]
          %v2246 = vld [vmem:[#allocation10 + $0x8] sm:$0xf]
          %v2247 = vld [vmem:[#allocation10 + $0xc] sm:$0xf]
          %v2248 = vld [vmem:[#allocation10 + $0x10] sm:$0xf]
          %v2249 = vld [vmem:[#allocation10 + $0x14] sm:$0xf]
          %v2250 = vld [vmem:[#allocation10 + $0x18] sm:$0xf]
          %v2251 = vld [vmem:[#allocation10 + $0x1c] sm:$0xf]
          %v2252 = vld [vmem:[#allocation10 + $0x20] sm:$0xf]
          %v2253 = vld [vmem:[#allocation10 + $0x24] sm:$0xf]
          %v2254 = vld [vmem:[#allocation10 + $0x28] sm:$0xf]
          %v2255 = vld [vmem:[#allocation10 + $0x2c] sm:$0xf]
          %v2256 = vld [vmem:[#allocation10 + $0x30] sm:$0xf]
          %v2257 = vld [vmem:[#allocation10 + $0x34] sm:$0xf]
          %v2258 = vld [vmem:[#allocation10 + $0x38] sm:$0xf]
          %v2259 = vld [vmem:[#allocation10 + $0x3c] sm:$0xf]
          %v2260 = vld [vmem:[#allocation11] sm:$0x1]
          %v2262 = vlaneseq
          %v2263 = vshrl.u32 %v2262, 7
          %v2264 = vsub.s32 0, %v2263
          %v2265 = vrot.slane %v2260, %v2264
          %v2283 = vunpack.c.l.b16 %v2244
          %v2284 = vunpack.c.l.b16 %v2245
          %v2285 = vunpack.c.l.b16 %v2246
          %v2286 = vunpack.c.l.b16 %v2247
          %v2287 = vunpack.c.l.b16 %v2248
          %v2288 = vunpack.c.l.b16 %v2249
          %v2289 = vunpack.c.l.b16 %v2250
          %v2290 = vunpack.c.l.b16 %v2251
          %v2291 = vunpack.c.l.b16 %v2252
          %v2292 = vunpack.c.l.b16 %v2253
          %v2293 = vunpack.c.l.b16 %v2254
          %v2294 = vunpack.c.l.b16 %v2255
          %v2295 = vunpack.c.l.b16 %v2256
          %v2296 = vunpack.c.l.b16 %v2257
          %v2297 = vunpack.c.l.b16 %v2258
          %v2298 = vunpack.c.l.b16 %v2259
          %v2299 = vpack.c.b16 %v2284, %v2283
          %v2300 = vpack.c.b16 %v2286, %v2285
          %v2301 = vpack.c.b16 %v2288, %v2287
          %v2302 = vpack.c.b16 %v2290, %v2289
          %v2303 = vpack.c.b16 %v2292, %v2291
          %v2304 = vpack.c.b16 %v2294, %v2293
          %v2305 = vpack.c.b16 %v2296, %v2295
          %v2306 = vpack.c.b16 %v2298, %v2297
          %2315 = vmatprep.subr.bf16.mxu0 0
          %2316 = vmatpush1.bf16.msra.mxu0 %v2299
          %2317 = vmatprep.subr.bf16.mxu0 0
          %2318 = vmatpush1.bf16.msra.mxu0 %v2300
          %2319 = vmatprep.subr.bf16.mxu0 0
          %2320 = vmatpush1.bf16.msra.mxu0 %v2301
          %2321 = vmatprep.subr.bf16.mxu0 0
          %2322 = vmatpush1.bf16.msra.mxu0 %v2302
          %2323 = vmatprep.subr.bf16.mxu0 0
          %2324 = vmatpush1.bf16.msra.mxu0 %v2303
          %2325 = vmatprep.subr.bf16.mxu0 0
          %2326 = vmatpush1.bf16.msra.mxu0 %v2304
          %2327 = vmatprep.subr.bf16.mxu0 0
          %2328 = vmatpush1.bf16.msra.mxu0 %v2305
          %2329 = vmatprep.subr.bf16.mxu0 0
          %2330 = vmatpush1.bf16.msra.mxu0 %v2306
          %2331 = vmatprep.subr.bf16.mxu0 0
          %2332 = vmatpush1.bf16.msra.mxu0 0
          %2333 = vmatprep.subr.bf16.mxu0 0
          %2334 = vmatpush1.bf16.msra.mxu0 0
          %2335 = vmatprep.subr.bf16.mxu0 0
          %2336 = vmatpush1.bf16.msra.mxu0 0
          %2337 = vmatprep.subr.bf16.mxu0 0
          %2338 = vmatpush1.bf16.msra.mxu0 0
          %2339 = vmatprep.subr.bf16.mxu0 0
          %2340 = vmatpush1.bf16.msra.mxu0 0
          %2341 = vmatprep.subr.bf16.mxu0 0
          %2342 = vmatpush1.bf16.msra.mxu0 0
          %2343 = vmatprep.subr.bf16.mxu0 0
          %2344 = vmatpush1.bf16.msra.mxu0 0
          %2345 = vmatprep.subr.bf16.mxu0 0
          %2346 = vmatpush1.bf16.msra.mxu0 0
          %2347 = vmatprep.mubr.bf16.mxu0 0
          %2348 = vmatmul.mubr.bf16.gmra.mrb[0].mxu0 %v2243
          %v2349 = vpop.f32.mrb[0].mxu0
          %v2350 = vadd.f32 %v2265, %v2349
          %v2351 = vpop.f32.mrb[0].mxu0
          %v2352 = vpop.f32.mrb[0].mxu0
          %v2353 = vpop.f32.mrb[0].mxu0
          %2354 = vdwg.mxu0
          %2355 = vmax.xlane.f32.xlu0 %v2350
          %v2356 = vpop.xlane.xlu0 %2355
          %v2357 = vsub.f32 %v2350, %v2356
          %v2358 = vmul.f32 %v2357, 1.442695
          %v2359 = vpow.pop %v2358
          %2360 = vadd.xlane.f32.xlu0 %v2359
          %v2361 = vpop.xlane.xlu0 %2360
          %v2362 = vlog2.pop %v2361
          %v2363 = vmul.f32 %v2362, 0.6931472
          %v2364 = vsub.f32 %v2357, %v2363
          %2365 = vst [vmem:[%s413] sm:$0xff] %v2364
        $region80: #{cifar_net_forward.1} parent=47 // pred_fallthru
          _
        %p2366 = scmp.lt.s32.totalorder %s28, 0
        %s2367 = scalar_select %p2366, %s28, 0
        %s2368 = smul.addr %s2367, 8
        %s2369 = scalar_lea.vmem %s7, %s2368
        // Predicated region
        $region81: #{cifar_net_forward.1} parent=47 // pred_check
          %p2370 = pneg %p213
        $region82: #{cifar_net_forward.1} parent=47 // pred_check_branch
          %2372 = sbr.rel (%p2370) target = $region84
        $region83: #{cifar_net_forward.1} parent=47 // pred_region
          _
        $region84: #{cifar_net_forward.1} parent=47 // pred_fallthru
          _
        // Predicated region
        $region85: #{cifar_net_forward.1} parent=47 // pred_check
          %p2373 = pneg %p213
        $region86: #{cifar_net_forward.1} parent=47 // pred_check_branch
          %2375 = sbr.rel (%p2373) target = $region88
        $region87: #{cifar_net_forward.1} parent=47 // pred_region
          %p2376 = scmp.lt.s32.totalorder %s28, 0
          %s2377 = scalar_select %p2376, %s28, 0
          %s2378 = smul.addr %s2377, 8
          %s2379 = scalar_lea.vmem %s7, %s2378
        $region88: #{cifar_net_forward.1} parent=47 // pred_fallthru
          _
      $region48: #{cifar_net_forward.1} parent=5 // pred_fallthru
        _
      %p2380 = scmp.le.s32.totalorder 2, %s19
      // Predicated region
      $region89: #{cifar_net_forward.1} parent=5 // pred_check
        %p2381 = pneg %p2380
      $region90: #{cifar_net_forward.1} parent=5 // pred_check_branch
        %2383 = sbr.rel (%p2381) target = $region92
      $region91: #{cifar_net_forward.1} parent=5 // pred_region
        %s2384 = ssub.s32 %s19, 2
      $region92: #{cifar_net_forward.1} parent=5 // pred_fallthru
        _
    $region6: #{cifar_net_forward.1} parent=1 // loop_footer
      %s23 = sadd.s32 1, %s19
    $region7: #{cifar_net_forward.1} parent=1 // loop_footer_branch
      %18 = sbr.rel target = $region3
    $region8: #{cifar_net_forward.1} parent=1 // loop_exit
      _
    %2385 = vsyncpa [#allocation4], 1
    %s2386 = scalar_lea.sflag [#allocation4], 1
    %2387 = vsyncpa %s2386, 1
    %2388 = vsyncpa [#allocation6], 1
    %2389 = vsyncpa [#allocation9], 1
    %2390 = vsyncpa [#allocation12], 1

</llo_original>
